<compile_context>
chip_gen: v7x
topology: tpu7x:2x2x1
jax: 0.10.0
libtpu: 0.0.40
codegen_flags: <defaults>
</compile_context>

<pallas_src>
import functools

import jax
import jax.numpy as jnp
from jax.experimental import pallas as pl
from jax.experimental.pallas import tpu as pltpu

EPS = 1e-5

# ---------------- model hyper-parameters (small, synthetic) -----------------
B = 2            # batch (number of prompts)
L = 8            # context length
D = 32           # transformer width
NUM_HEADS = 4
NUM_LAYERS = 2
D_OUT = 32       # text_projection output dim (embed_dim)


def _layer_norm(x, g, b):
    mu = jnp.mean(x, axis=-1, keepdims=True)
    xc = x - mu
    var = jnp.mean(xc * xc, axis=-1, keepdims=True)
    return xc * jax.lax.rsqrt(var + EPS) * g + b


def text_encoder_kernel(x_ref, pos_ref, amask_ref, rep_ref, expand_ref, bsum_ref,
                        sel_ref,
                        ln1_g_ref, ln1_b_ref, wqkv_ref, bqkv_ref, wo_ref, bo_ref,
                        ln2_g_ref, ln2_b_ref, w1_ref, b1_ref, w2_ref, b2_ref,
                        lnf_g_ref, lnf_b_ref, tproj_ref,
                        out_ref, *, num_layers, d, scale):
    # x = prompts + positional_embedding, batch folded into rows: (BL, D)
    x = x_ref[...] + pos_ref[...]
    amask = amask_ref[...]      # (BL, H*BL)    additive 0 / -1e30 causal+sequence mask
    rep = rep_ref[...]          # (H*BL, BL)    head-block replication matrix
    expand = expand_ref[...]    # (H*BL, D)     head-block feature mask (K and V)
    bsum = bsum_ref[...]        # (H*BL, H*BL)  block-diagonal ones (per-head softmax sums)

    for l in range(num_layers):
        # ---- residual attention block: x = x + attn(ln_1(x)) ----
        xn = _layer_norm(x, ln1_g_ref[l], ln1_b_ref[l])
        # fused QKV: one 96-lane MXU push, then static lane slices (VPU/XLU slack)
        qkv = jnp.dot(xn, wqkv_ref[l], preferred_element_type=jnp.float32) + bqkv_ref[l]
        q = qkv[:, :d] * scale
        k = qkv[:, d:2 * d]
        v = qkv[:, 2 * d:]

        # expanded K / V without sublane concat: replicate via matmul, mask per head
        k_big = jnp.dot(rep, k, preferred_element_type=jnp.float32) * expand   # (H*BL, D)
        v_big = jnp.dot(rep, v, preferred_element_type=jnp.float32) * expand   # (H*BL, D)

        # all-head scores in one MXU op; column block h*BL:(h+1)*BL == q_h @ k_h^T
        s = jnp.einsum("rd,cd->rc", q, k_big,
                       preferred_element_type=jnp.float32) + amask             # (BL, H*BL)
        m = jnp.max(s, axis=-1, keepdims=True)        # masked entries can't dominate
        e = jnp.exp(s - m)
        denom = jnp.dot(e, bsum, preferred_element_type=jnp.float32)           # per-head sums
        p = e * pl.reciprocal(denom, approx=True)                              # EUP reciprocal
        attn = jnp.dot(p, v_big, preferred_element_type=jnp.float32)           # (BL, D), heads merged
        attn = jnp.dot(attn, wo_ref[l], preferred_element_type=jnp.float32) + bo_ref[l]
        x = x + attn

        # ---- residual MLP block: x = x + mlp(ln_2(x)) ----
        xn = _layer_norm(x, ln2_g_ref[l], ln2_b_ref[l])
        h1 = jnp.dot(xn, w1_ref[l], preferred_element_type=jnp.float32) + b1_ref[l]
        h1 = h1 * jax.nn.sigmoid(1.702 * h1)                                   # QuickGELU
        h2 = jnp.dot(h1, w2_ref[l], preferred_element_type=jnp.float32) + b2_ref[l]
        x = x + h2

    # ln_final, EOT gather (one-hot matmul), lane- and sublane-dense projection
    xn = _layer_norm(x, lnf_g_ref[...], lnf_b_ref[...])                        # (BL, D)
    rows = jnp.dot(sel_ref[...], xn, preferred_element_type=jnp.float32)       # (8, D)
    out_ref[...] = jnp.dot(rows, tproj_ref[...],
                           preferred_element_type=jnp.float32)                 # (8, 128) full tile


def prepare_text_encoder(params, batch):
    """One-time (init) preprocessing: masks, tiled positions, padded projection."""
    l, d = params["pos"].shape
    h = NUM_HEADS
    dh = d // h
    bl = batch * l
    d_out = params["tproj"].shape[1]
    d_pad = 128 * ((d_out + 127) // 128)

    # causal + same-sequence additive mask, tiled per head along the key axis
    r = jnp.arange(bl)
    seq_id, pos_id = r // l, r % l
    base = ((seq_id[:, None] == seq_id[None, :]) &
            (pos_id[None, :] <= pos_id[:, None]))                              # (BL, BL) bool
    amask = jnp.where(jnp.tile(base, (1, h)), 0.0, -1e30).astype(jnp.float32)  # (BL, H*BL)

    c = jnp.arange(h * bl)
    rep = (c[:, None] % bl == jnp.arange(bl)[None, :]).astype(jnp.float32)     # (H*BL, BL)
    expand = (c[:, None] // bl ==
              jnp.arange(d)[None, :] // dh).astype(jnp.float32)                # (H*BL, D)
    bsum = (c[:, None] // bl == c[None, :] // bl).astype(jnp.float32)          # (H*BL, H*BL)

    # zero-pad text_projection so the kernel writes a 128-lane-dense slab
    tproj_pad = jnp.zeros((d, d_pad), jnp.float32).at[:, :d_out].set(params["tproj"])
    pos_flat = jnp.tile(params["pos"], (batch, 1))                             # (BL, D)

    prep = dict(params)
    prep.update(pos_flat=pos_flat, amask=amask, rep=rep, expand=expand,
                bsum=bsum, tproj_pad=tproj_pad)
    return prep


def _cost_estimate(bl, hbl, d, d_pad, n_layers, r_out, in_bytes, out_bytes):
    per_layer = (2 * bl * d * 3 * d            # fused QKV
                 + 2 * 2 * hbl * bl * d        # rep matmuls (K, V)
                 + 2 * bl * hbl * d            # scores
                 + 2 * bl * hbl * hbl          # per-head denom sums
                 + 2 * bl * hbl * d            # PV
                 + 2 * bl * d * d              # out-proj
                 + 2 * 2 * bl * d * 4 * d)     # MLP
    flops = n_layers * per_layer + 2 * r_out * bl * d + 2 * r_out * d * d_pad
    transcendentals = n_layers * (bl * hbl + bl * 4 * d + 3 * bl) + bl
    return pl.CostEstimate(flops=flops, transcendentals=transcendentals,
                           bytes_accessed=in_bytes + out_bytes)


@jax.jit
def text_encoder(prompts, tokenized_prompts, prep):
    """prompts: (B, L, D) f32; tokenized_prompts: (B, L) int32 -> (B, D_OUT) f32."""
    b, l, d = prompts.shape
    bl = b * l
    h = NUM_HEADS
    hbl = h * bl
    d_out = prep["tproj"].shape[1]
    d_pad = prep["tproj_pad"].shape[1]
    r_out = max(8, ((b + 7) // 8) * 8)          # full sublane tile for the output store

    # per-call, data-dependent only: EOT one-hot row selector, padded to 8 rows
    eot = jnp.argmax(tokenized_prompts, axis=-1)
    sel = jax.nn.one_hot(jnp.arange(b) * l + eot, bl, dtype=jnp.float32)       # (B, BL)
    sel_pad = jnp.zeros((r_out, bl), jnp.float32).at[:b].set(sel)

    prompts_flat = prompts.reshape(bl, d)

    args = (prompts_flat, prep["pos_flat"], prep["amask"], prep["rep"],
            prep["expand"], prep["bsum"], sel_pad,
            prep["ln1_g"], prep["ln1_b"], prep["wqkv"], prep["bqkv"],
            prep["wo"], prep["bo"], prep["ln2_g"], prep["ln2_b"],
            prep["w1"], prep["b1"], prep["w2"], prep["b2"],
            prep["lnf_g"], prep["lnf_b"], prep["tproj_pad"])
    in_bytes = sum(int(a.size) * 4 for a in args)
    out_bytes = r_out * d_pad * 4

    kernel = functools.partial(text_encoder_kernel, num_layers=NUM_LAYERS,
                               d=d, scale=1.0 / ((d // h) ** 0.5))

    # Single invocation, no grid: at this toy size per-grid-step overhead
    # dominates, so everything stays VMEM-resident in one shot.
    out = pl.pallas_call(
        kernel,
        out_shape=jax.ShapeDtypeStruct((r_out, d_pad), jnp.float32),
        compiler_params=pltpu.CompilerParams(vmem_limit_bytes=32 * 1024 * 1024),
        cost_estimate=_cost_estimate(bl, hbl, d, d_pad, NUM_LAYERS, r_out,
                                     in_bytes, out_bytes),
    )(*args)
    return out[:b, :d_out]


# ------------------------- pure-JAX reference --------------------------------
def text_encoder_ref(prompts, tokenized_prompts, params):
    def ln(x, g, b):
        mu = x.mean(-1, keepdims=True)
        var = ((x - mu) ** 2).mean(-1, keepdims=True)
        return (x - mu) / jnp.sqrt(var + EPS) * g + b

    b, l, d = prompts.shape
    dh = d // NUM_HEADS
    scale = 1.0 / (dh ** 0.5)
    x = prompts + params["pos"]
    row = jnp.arange(l)[:, None]
    col = jnp.arange(l)[None, :]
    mask = jnp.where(col > row, -1e30, 0.0).astype(jnp.float32)

    for li in range(NUM_LAYERS):
        xn = ln(x, params["ln1_g"][li, 0], params["ln1_b"][li, 0])
        qkv = xn @ params["wqkv"][li] + params["bqkv"][li, 0]
        q, k, v = qkv[..., :d] * scale, qkv[..., d:2 * d], qkv[..., 2 * d:]
        q = q.reshape(b, l, NUM_HEADS, dh).transpose(0, 2, 1, 3)
        k = k.reshape(b, l, NUM_HEADS, dh).transpose(0, 2, 1, 3)
        v = v.reshape(b, l, NUM_HEADS, dh).transpose(0, 2, 1, 3)
        s = jnp.einsum("bhqd,bhkd->bhqk", q, k) + mask
        p = jax.nn.softmax(s, axis=-1)
        o = jnp.einsum("bhqk,bhkd->bhqd", p, v).transpose(0, 2, 1, 3).reshape(b, l, d)
        x = x + (o @ params["wo"][li] + params["bo"][li, 0])
        xn = ln(x, params["ln2_g"][li, 0], params["ln2_b"][li, 0])
        h1 = xn @ params["w1"][li] + params["b1"][li, 0]
        h1 = h1 * jax.nn.sigmoid(1.702 * h1)
        x = x + (h1 @ params["w2"][li] + params["b2"][li, 0])

    x = ln(x, params["lnf_g"][0], params["lnf_b"][0])
    eot = jnp.argmax(tokenized_prompts, axis=-1)
    return x[jnp.arange(b), eot] @ params["tproj"]


# ----------------------------- parameter init --------------------------------
def make_params(key):
    ks = jax.random.split(key, 12)
    s = 0.02
    nrm = lambda k, shape: s * jax.random.normal(k, shape, dtype=jnp.float32)
    return {
        "pos":   nrm(ks[0], (L, D)),
        "ln1_g": jnp.ones((NUM_LAYERS, 1, D), jnp.float32),
        "ln1_b": jnp.zeros((NUM_LAYERS, 1, D), jnp.float32),
        "wqkv":  nrm(ks[1], (NUM_LAYERS, D, 3 * D)),
        "bqkv":  nrm(ks[2], (NUM_LAYERS, 1, 3 * D)),
        "wo":    nrm(ks[3], (NUM_LAYERS, D, D)),
        "bo":    nrm(ks[4], (NUM_LAYERS, 1, D)),
        "ln2_g": jnp.ones((NUM_LAYERS, 1, D), jnp.float32),
        "ln2_b": jnp.zeros((NUM_LAYERS, 1, D), jnp.float32),
        "w1":    nrm(ks[5], (NUM_LAYERS, D, 4 * D)),
        "b1":    nrm(ks[6], (NUM_LAYERS, 1, 4 * D)),
        "w2":    nrm(ks[7], (NUM_LAYERS, 4 * D, D)),
        "b2":    nrm(ks[8], (NUM_LAYERS, 1, D)),
        "lnf_g": jnp.ones((1, D), jnp.float32),
        "lnf_b": jnp.zeros((1, D), jnp.float32),
        "tproj": nrm(ks[9], (D, D_OUT)),
    }


if __name__ == "__main__":
    key = jax.random.PRNGKey(0)
    kp, kx, kt = jax.random.split(key, 3)
    params = make_params(kp)

    # One-time preprocessing (masks, padded projection, tiled positions) —
    # hoisted out of the per-call path.
    prep = jax.tree_util.tree_map(jax.block_until_ready,
                                  prepare_text_encoder(params, B))

    prompts = 0.1 * jax.random.normal(kx, (B, L, D), dtype=jnp.float32)
    # synthetic tokenized prompts: random tokens with an EOT (large id) per row
    tokenized = jax.random.randint(kt, (B, L), 1, 1000, dtype=jnp.int32)
    eot_pos = jnp.array([5, 3], dtype=jnp.int32)
    tokenized = tokenized.at[jnp.arange(B), eot_pos].set(49407)

    out = text_encoder(prompts, tokenized, prep)
    out = jax.block_until_ready(out)

    ref = text_encoder_ref(prompts, tokenized, params)
    assert out.shape == (B, D_OUT)
    # tolerance accounts for the EUP approximate reciprocal in the softmax
    assert jnp.allclose(out, ref, atol=1e-3, rtol=1e-3), (
        f"mismatch: max err {jnp.max(jnp.abs(out - ref))}")
    print("KERNEL_OK")
</pallas_src>

<mosaic_0001>
module attributes {stable_mosaic.version = 11 : i64} {
  func.func @text_encoder_kernel(%arg0: memref<16x32xf32, #tpu.memory_space<vmem>>, %arg1: memref<16x32xf32, #tpu.memory_space<vmem>>, %arg2: memref<16x64xf32, #tpu.memory_space<vmem>>, %arg3: memref<64x16xf32, #tpu.memory_space<vmem>>, %arg4: memref<64x32xf32, #tpu.memory_space<vmem>>, %arg5: memref<64x64xf32, #tpu.memory_space<vmem>>, %arg6: memref<8x16xf32, #tpu.memory_space<vmem>>, %arg7: memref<2x1x32xf32, #tpu.memory_space<vmem>>, %arg8: memref<2x1x32xf32, #tpu.memory_space<vmem>>, %arg9: memref<2x32x96xf32, #tpu.memory_space<vmem>>, %arg10: memref<2x1x96xf32, #tpu.memory_space<vmem>>, %arg11: memref<2x32x32xf32, #tpu.memory_space<vmem>>, %arg12: memref<2x1x32xf32, #tpu.memory_space<vmem>>, %arg13: memref<2x1x32xf32, #tpu.memory_space<vmem>>, %arg14: memref<2x1x32xf32, #tpu.memory_space<vmem>>, %arg15: memref<2x32x128xf32, #tpu.memory_space<vmem>>, %arg16: memref<2x1x128xf32, #tpu.memory_space<vmem>>, %arg17: memref<2x128x32xf32, #tpu.memory_space<vmem>>, %arg18: memref<2x1x32xf32, #tpu.memory_space<vmem>>, %arg19: memref<1x32xf32, #tpu.memory_space<vmem>>, %arg20: memref<1x32xf32, #tpu.memory_space<vmem>>, %arg21: memref<32x128xf32, #tpu.memory_space<vmem>>, %arg22: memref<8x128xf32, #tpu.memory_space<vmem>>) attributes {dimension_semantics = [], scalar_prefetch = 0 : i64, scratch_operands = 0 : i64, tpu.core_type = #tpu.core_type<tc>} {
    %c0 = arith.constant 0 : index
    %c0_0 = arith.constant 0 : index
    %0 = vector.load %arg0[%c0, %c0_0] : memref<16x32xf32, #tpu.memory_space<vmem>>, vector<16x32xf32>
    %c0_1 = arith.constant 0 : index
    %c0_2 = arith.constant 0 : index
    %1 = vector.load %arg1[%c0_1, %c0_2] : memref<16x32xf32, #tpu.memory_space<vmem>>, vector<16x32xf32>
    %2 = arith.addf %0, %1 : vector<16x32xf32>
    %c0_3 = arith.constant 0 : index
    %c0_4 = arith.constant 0 : index
    %3 = vector.load %arg2[%c0_3, %c0_4] : memref<16x64xf32, #tpu.memory_space<vmem>>, vector<16x64xf32>
    %c0_5 = arith.constant 0 : index
    %c0_6 = arith.constant 0 : index
    %4 = vector.load %arg3[%c0_5, %c0_6] : memref<64x16xf32, #tpu.memory_space<vmem>>, vector<64x16xf32>
    %c0_7 = arith.constant 0 : index
    %c0_8 = arith.constant 0 : index
    %5 = vector.load %arg4[%c0_7, %c0_8] : memref<64x32xf32, #tpu.memory_space<vmem>>, vector<64x32xf32>
    %c0_9 = arith.constant 0 : index
    %c0_10 = arith.constant 0 : index
    %6 = vector.load %arg5[%c0_9, %c0_10] : memref<64x64xf32, #tpu.memory_space<vmem>>, vector<64x64xf32>
    %c0_11 = arith.constant 0 : index
    %c0_12 = arith.constant 0 : index
    %c0_13 = arith.constant 0 : index
    %7 = vector.load %arg7[%c0_11, %c0_12, %c0_13] : memref<2x1x32xf32, #tpu.memory_space<vmem>>, vector<1x1x32xf32>
    %8 = vector.shape_cast %7 : vector<1x1x32xf32> to vector<1x32xf32>
    %c0_14 = arith.constant 0 : index
    %c0_15 = arith.constant 0 : index
    %c0_16 = arith.constant 0 : index
    %9 = vector.load %arg8[%c0_14, %c0_15, %c0_16] : memref<2x1x32xf32, #tpu.memory_space<vmem>>, vector<1x1x32xf32>
    %10 = vector.shape_cast %9 : vector<1x1x32xf32> to vector<1x32xf32>
    %cst = arith.constant dense<0.000000e+00> : vector<16xf32>
    %11 = vector.multi_reduction <add>, %2, %cst [1] : vector<16x32xf32> to vector<16xf32>
    %12 = vector.shape_cast %11 : vector<16xf32> to vector<16x1xf32>
    %cst_17 = arith.constant 3.200000e+01 : f32
    %13 = vector.broadcast %cst_17 : f32 to vector<16x1xf32>
    %14 = arith.divf %12, %13 : vector<16x1xf32>
    %15 = vector.broadcast %14 : vector<16x1xf32> to vector<16x32xf32>
    %16 = arith.subf %2, %15 : vector<16x32xf32>
    %17 = arith.mulf %16, %16 : vector<16x32xf32>
    %cst_18 = arith.constant dense<0.000000e+00> : vector<16xf32>
    %18 = vector.multi_reduction <add>, %17, %cst_18 [1] : vector<16x32xf32> to vector<16xf32>
    %19 = vector.shape_cast %18 : vector<16xf32> to vector<16x1xf32>
    %cst_19 = arith.constant 3.200000e+01 : f32
    %20 = vector.broadcast %cst_19 : f32 to vector<16x1xf32>
    %21 = arith.divf %19, %20 : vector<16x1xf32>
    %cst_20 = arith.constant 9.99999974E-6 : f32
    %22 = vector.broadcast %cst_20 : f32 to vector<16x1xf32>
    %23 = arith.addf %21, %22 : vector<16x1xf32>
    %24 = math.rsqrt %23 : vector<16x1xf32>
    %25 = vector.broadcast %24 : vector<16x1xf32> to vector<16x32xf32>
    %26 = arith.mulf %16, %25 : vector<16x32xf32>
    %27 = vector.broadcast %8 : vector<1x32xf32> to vector<16x32xf32>
    %28 = arith.mulf %26, %27 : vector<16x32xf32>
    %29 = vector.broadcast %10 : vector<1x32xf32> to vector<16x32xf32>
    %30 = arith.addf %28, %29 : vector<16x32xf32>
    %c0_21 = arith.constant 0 : index
    %c0_22 = arith.constant 0 : index
    %c0_23 = arith.constant 0 : index
    %31 = vector.load %arg9[%c0_21, %c0_22, %c0_23] : memref<2x32x96xf32, #tpu.memory_space<vmem>>, vector<1x32x96xf32>
    %32 = vector.shape_cast %31 : vector<1x32x96xf32> to vector<32x96xf32>
    %cst_24 = arith.constant dense<0.000000e+00> : vector<16x96xf32>
    %33 = tpu.matmul %30, %32, %cst_24 {dimension_numbers = #tpu.dot_dimension_numbers<[1], [0], [0], [1], [0, 0, 1, 1], [], []>} : vector<16x32xf32>, vector<32x96xf32>, vector<16x96xf32> -> vector<16x96xf32>
    %c0_25 = arith.constant 0 : index
    %c0_26 = arith.constant 0 : index
    %c0_27 = arith.constant 0 : index
    %34 = vector.load %arg10[%c0_25, %c0_26, %c0_27] : memref<2x1x96xf32, #tpu.memory_space<vmem>>, vector<1x1x96xf32>
    %35 = vector.shape_cast %34 : vector<1x1x96xf32> to vector<1x96xf32>
    %36 = vector.broadcast %35 : vector<1x96xf32> to vector<16x96xf32>
    %37 = arith.addf %33, %36 : vector<16x96xf32>
    %38 = vector.extract_strided_slice %37 {offsets = [0, 0], sizes = [16, 32], strides = [1, 1]} : vector<16x96xf32> to vector<16x32xf32>
    %cst_28 = arith.constant 0.353553385 : f32
    %39 = vector.broadcast %cst_28 : f32 to vector<16x32xf32>
    %40 = arith.mulf %38, %39 : vector<16x32xf32>
    %41 = vector.extract_strided_slice %37 {offsets = [0, 32], sizes = [16, 32], strides = [1, 1]} : vector<16x96xf32> to vector<16x32xf32>
    %42 = vector.extract_strided_slice %37 {offsets = [0, 64], sizes = [16, 32], strides = [1, 1]} : vector<16x96xf32> to vector<16x32xf32>
    %cst_29 = arith.constant dense<0.000000e+00> : vector<64x32xf32>
    %43 = tpu.matmul %4, %41, %cst_29 {dimension_numbers = #tpu.dot_dimension_numbers<[1], [0], [0], [1], [0, 0, 1, 1], [], []>} : vector<64x16xf32>, vector<16x32xf32>, vector<64x32xf32> -> vector<64x32xf32>
    %44 = arith.mulf %43, %5 : vector<64x32xf32>
    %cst_30 = arith.constant dense<0.000000e+00> : vector<64x32xf32>
    %45 = tpu.matmul %4, %42, %cst_30 {dimension_numbers = #tpu.dot_dimension_numbers<[1], [0], [0], [1], [0, 0, 1, 1], [], []>} : vector<64x16xf32>, vector<16x32xf32>, vector<64x32xf32> -> vector<64x32xf32>
    %46 = arith.mulf %45, %5 : vector<64x32xf32>
    "tpu.trace_start"() <{level = 10 : i32, message = "rd,cd->rc"}> : () -> ()
    %cst_31 = arith.constant dense<0.000000e+00> : vector<16x64xf32>
    %47 = tpu.matmul %40, %44, %cst_31 {dimension_numbers = #tpu.dot_dimension_numbers<[1], [1], [0], [0], [0, 0, 1, 0], [], []>} : vector<16x32xf32>, vector<64x32xf32>, vector<16x64xf32> -> vector<16x64xf32>
    "tpu.trace_stop"() : () -> ()
    %48 = arith.addf %47, %3 : vector<16x64xf32>
    %cst_32 = arith.constant dense<0xFF800000> : vector<16xf32>
    %49 = vector.multi_reduction <maximumf>, %48, %cst_32 [1] : vector<16x64xf32> to vector<16xf32>
    %50 = vector.shape_cast %49 : vector<16xf32> to vector<16x1xf32>
    %51 = vector.broadcast %50 : vector<16x1xf32> to vector<16x64xf32>
    %52 = arith.subf %48, %51 : vector<16x64xf32>
    %53 = math.exp %52 : vector<16x64xf32>
    %cst_33 = arith.constant dense<0.000000e+00> : vector<16x64xf32>
    %54 = tpu.matmul %53, %6, %cst_33 {dimension_numbers = #tpu.dot_dimension_numbers<[1], [0], [0], [1], [0, 0, 1, 1], [], []>} : vector<16x64xf32>, vector<64x64xf32>, vector<16x64xf32> -> vector<16x64xf32>
    %55 = tpu.reciprocal %54 {approx = true} : vector<16x64xf32> -> vector<16x64xf32>
    %56 = arith.mulf %53, %55 : vector<16x64xf32>
    %cst_34 = arith.constant dense<0.000000e+00> : vector<16x32xf32>
    %57 = tpu.matmul %56, %46, %cst_34 {dimension_numbers = #tpu.dot_dimension_numbers<[1], [0], [0], [1], [0, 0, 1, 1], [], []>} : vector<16x64xf32>, vector<64x32xf32>, vector<16x32xf32> -> vector<16x32xf32>
    %c0_35 = arith.constant 0 : index
    %c0_36 = arith.constant 0 : index
    %c0_37 = arith.constant 0 : index
    %58 = vector.load %arg11[%c0_35, %c0_36, %c0_37] : memref<2x32x32xf32, #tpu.memory_space<vmem>>, vector<1x32x32xf32>
    %59 = vector.shape_cast %58 : vector<1x32x32xf32> to vector<32x32xf32>
    %cst_38 = arith.constant dense<0.000000e+00> : vector<16x32xf32>
    %60 = tpu.matmul %57, %59, %cst_38 {dimension_numbers = #tpu.dot_dimension_numbers<[1], [0], [0], [1], [0, 0, 1, 1], [], []>} : vector<16x32xf32>, vector<32x32xf32>, vector<16x32xf32> -> vector<16x32xf32>
    %c0_39 = arith.constant 0 : index
    %c0_40 = arith.constant 0 : index
    %c0_41 = arith.constant 0 : index
    %61 = vector.load %arg12[%c0_39, %c0_40, %c0_41] : memref<2x1x32xf32, #tpu.memory_space<vmem>>, vector<1x1x32xf32>
    %62 = vector.shape_cast %61 : vector<1x1x32xf32> to vector<1x32xf32>
    %63 = vector.broadcast %62 : vector<1x32xf32> to vector<16x32xf32>
    %64 = arith.addf %60, %63 : vector<16x32xf32>
    %65 = arith.addf %2, %64 : vector<16x32xf32>
    %c0_42 = arith.constant 0 : index
    %c0_43 = arith.constant 0 : index
    %c0_44 = arith.constant 0 : index
    %66 = vector.load %arg13[%c0_42, %c0_43, %c0_44] : memref<2x1x32xf32, #tpu.memory_space<vmem>>, vector<1x1x32xf32>
    %67 = vector.shape_cast %66 : vector<1x1x32xf32> to vector<1x32xf32>
    %c0_45 = arith.constant 0 : index
    %c0_46 = arith.constant 0 : index
    %c0_47 = arith.constant 0 : index
    %68 = vector.load %arg14[%c0_45, %c0_46, %c0_47] : memref<2x1x32xf32, #tpu.memory_space<vmem>>, vector<1x1x32xf32>
    %69 = vector.shape_cast %68 : vector<1x1x32xf32> to vector<1x32xf32>
    %cst_48 = arith.constant dense<0.000000e+00> : vector<16xf32>
    %70 = vector.multi_reduction <add>, %65, %cst_48 [1] : vector<16x32xf32> to vector<16xf32>
    %71 = vector.shape_cast %70 : vector<16xf32> to vector<16x1xf32>
    %cst_49 = arith.constant 3.200000e+01 : f32
    %72 = vector.broadcast %cst_49 : f32 to vector<16x1xf32>
    %73 = arith.divf %71, %72 : vector<16x1xf32>
    %74 = vector.broadcast %73 : vector<16x1xf32> to vector<16x32xf32>
    %75 = arith.subf %65, %74 : vector<16x32xf32>
    %76 = arith.mulf %75, %75 : vector<16x32xf32>
    %cst_50 = arith.constant dense<0.000000e+00> : vector<16xf32>
    %77 = vector.multi_reduction <add>, %76, %cst_50 [1] : vector<16x32xf32> to vector<16xf32>
    %78 = vector.shape_cast %77 : vector<16xf32> to vector<16x1xf32>
    %cst_51 = arith.constant 3.200000e+01 : f32
    %79 = vector.broadcast %cst_51 : f32 to vector<16x1xf32>
    %80 = arith.divf %78, %79 : vector<16x1xf32>
    %cst_52 = arith.constant 9.99999974E-6 : f32
    %81 = vector.broadcast %cst_52 : f32 to vector<16x1xf32>
    %82 = arith.addf %80, %81 : vector<16x1xf32>
    %83 = math.rsqrt %82 : vector<16x1xf32>
    %84 = vector.broadcast %83 : vector<16x1xf32> to vector<16x32xf32>
    %85 = arith.mulf %75, %84 : vector<16x32xf32>
    %86 = vector.broadcast %67 : vector<1x32xf32> to vector<16x32xf32>
    %87 = arith.mulf %85, %86 : vector<16x32xf32>
    %88 = vector.broadcast %69 : vector<1x32xf32> to vector<16x32xf32>
    %89 = arith.addf %87, %88 : vector<16x32xf32>
    %c0_53 = arith.constant 0 : index
    %c0_54 = arith.constant 0 : index
    %c0_55 = arith.constant 0 : index
    %90 = vector.load %arg15[%c0_53, %c0_54, %c0_55] : memref<2x32x128xf32, #tpu.memory_space<vmem>>, vector<1x32x128xf32>
    %91 = vector.shape_cast %90 : vector<1x32x128xf32> to vector<32x128xf32>
    %cst_56 = arith.constant dense<0.000000e+00> : vector<16x128xf32>
    %92 = tpu.matmul %89, %91, %cst_56 {dimension_numbers = #tpu.dot_dimension_numbers<[1], [0], [0], [1], [0, 0, 1, 1], [], []>} : vector<16x32xf32>, vector<32x128xf32>, vector<16x128xf32> -> vector<16x128xf32>
    %c0_57 = arith.constant 0 : index
    %c0_58 = arith.constant 0 : index
    %c0_59 = arith.constant 0 : index
    %93 = vector.load %arg16[%c0_57, %c0_58, %c0_59] : memref<2x1x128xf32, #tpu.memory_space<vmem>>, vector<1x1x128xf32>
    %94 = vector.shape_cast %93 : vector<1x1x128xf32> to vector<1x128xf32>
    %95 = vector.broadcast %94 : vector<1x128xf32> to vector<16x128xf32>
    %96 = arith.addf %92, %95 : vector<16x128xf32>
    %cst_60 = arith.constant 1.702000e+00 : f32
    %97 = vector.broadcast %cst_60 : f32 to vector<16x128xf32>
    %98 = arith.mulf %97, %96 : vector<16x128xf32>
    %99 = arith.negf %98 : vector<16x128xf32>
    %100 = math.exp %99 : vector<16x128xf32>
    %cst_61 = arith.constant 1.000000e+00 : f32
    %101 = vector.broadcast %cst_61 : f32 to vector<16x128xf32>
    %102 = arith.addf %101, %100 : vector<16x128xf32>
    %103 = arith.divf %101, %102 : vector<16x128xf32>
    %104 = arith.mulf %96, %103 : vector<16x128xf32>
    %c0_62 = arith.constant 0 : index
    %c0_63 = arith.constant 0 : index
    %c0_64 = arith.constant 0 : index
    %105 = vector.load %arg17[%c0_62, %c0_63, %c0_64] : memref<2x128x32xf32, #tpu.memory_space<vmem>>, vector<1x128x32xf32>
    %106 = vector.shape_cast %105 : vector<1x128x32xf32> to vector<128x32xf32>
    %cst_65 = arith.constant dense<0.000000e+00> : vector<16x32xf32>
    %107 = tpu.matmul %104, %106, %cst_65 {dimension_numbers = #tpu.dot_dimension_numbers<[1], [0], [0], [1], [0, 0, 1, 1], [], []>} : vector<16x128xf32>, vector<128x32xf32>, vector<16x32xf32> -> vector<16x32xf32>
    %c0_66 = arith.constant 0 : index
    %c0_67 = arith.constant 0 : index
    %c0_68 = arith.constant 0 : index
    %108 = vector.load %arg18[%c0_66, %c0_67, %c0_68] : memref<2x1x32xf32, #tpu.memory_space<vmem>>, vector<1x1x32xf32>
    %109 = vector.shape_cast %108 : vector<1x1x32xf32> to vector<1x32xf32>
    %110 = vector.broadcast %109 : vector<1x32xf32> to vector<16x32xf32>
    %111 = arith.addf %107, %110 : vector<16x32xf32>
    %112 = arith.addf %65, %111 : vector<16x32xf32>
    %c1 = arith.constant 1 : index
    %c0_69 = arith.constant 0 : index
    %c0_70 = arith.constant 0 : index
    %113 = vector.load %arg7[%c1, %c0_69, %c0_70] : memref<2x1x32xf32, #tpu.memory_space<vmem>>, vector<1x1x32xf32>
    %114 = vector.shape_cast %113 : vector<1x1x32xf32> to vector<1x32xf32>
    %c1_71 = arith.constant 1 : index
    %c0_72 = arith.constant 0 : index
    %c0_73 = arith.constant 0 : index
    %115 = vector.load %arg8[%c1_71, %c0_72, %c0_73] : memref<2x1x32xf32, #tpu.memory_space<vmem>>, vector<1x1x32xf32>
    %116 = vector.shape_cast %115 : vector<1x1x32xf32> to vector<1x32xf32>
    %cst_74 = arith.constant dense<0.000000e+00> : vector<16xf32>
    %117 = vector.multi_reduction <add>, %112, %cst_74 [1] : vector<16x32xf32> to vector<16xf32>
    %118 = vector.shape_cast %117 : vector<16xf32> to vector<16x1xf32>
    %cst_75 = arith.constant 3.200000e+01 : f32
    %119 = vector.broadcast %cst_75 : f32 to vector<16x1xf32>
    %120 = arith.divf %118, %119 : vector<16x1xf32>
    %121 = vector.broadcast %120 : vector<16x1xf32> to vector<16x32xf32>
    %122 = arith.subf %112, %121 : vector<16x32xf32>
    %123 = arith.mulf %122, %122 : vector<16x32xf32>
    %cst_76 = arith.constant dense<0.000000e+00> : vector<16xf32>
    %124 = vector.multi_reduction <add>, %123, %cst_76 [1] : vector<16x32xf32> to vector<16xf32>
    %125 = vector.shape_cast %124 : vector<16xf32> to vector<16x1xf32>
    %cst_77 = arith.constant 3.200000e+01 : f32
    %126 = vector.broadcast %cst_77 : f32 to vector<16x1xf32>
    %127 = arith.divf %125, %126 : vector<16x1xf32>
    %cst_78 = arith.constant 9.99999974E-6 : f32
    %128 = vector.broadcast %cst_78 : f32 to vector<16x1xf32>
    %129 = arith.addf %127, %128 : vector<16x1xf32>
    %130 = math.rsqrt %129 : vector<16x1xf32>
    %131 = vector.broadcast %130 : vector<16x1xf32> to vector<16x32xf32>
    %132 = arith.mulf %122, %131 : vector<16x32xf32>
    %133 = vector.broadcast %114 : vector<1x32xf32> to vector<16x32xf32>
    %134 = arith.mulf %132, %133 : vector<16x32xf32>
    %135 = vector.broadcast %116 : vector<1x32xf32> to vector<16x32xf32>
    %136 = arith.addf %134, %135 : vector<16x32xf32>
    %c1_79 = arith.constant 1 : index
    %c0_80 = arith.constant 0 : index
    %c0_81 = arith.constant 0 : index
    %137 = vector.load %arg9[%c1_79, %c0_80, %c0_81] : memref<2x32x96xf32, #tpu.memory_space<vmem>>, vector<1x32x96xf32>
    %138 = vector.shape_cast %137 : vector<1x32x96xf32> to vector<32x96xf32>
    %cst_82 = arith.constant dense<0.000000e+00> : vector<16x96xf32>
    %139 = tpu.matmul %136, %138, %cst_82 {dimension_numbers = #tpu.dot_dimension_numbers<[1], [0], [0], [1], [0, 0, 1, 1], [], []>} : vector<16x32xf32>, vector<32x96xf32>, vector<16x96xf32> -> vector<16x96xf32>
    %c1_83 = arith.constant 1 : index
    %c0_84 = arith.constant 0 : index
    %c0_85 = arith.constant 0 : index
    %140 = vector.load %arg10[%c1_83, %c0_84, %c0_85] : memref<2x1x96xf32, #tpu.memory_space<vmem>>, vector<1x1x96xf32>
    %141 = vector.shape_cast %140 : vector<1x1x96xf32> to vector<1x96xf32>
    %142 = vector.broadcast %141 : vector<1x96xf32> to vector<16x96xf32>
    %143 = arith.addf %139, %142 : vector<16x96xf32>
    %144 = vector.extract_strided_slice %143 {offsets = [0, 0], sizes = [16, 32], strides = [1, 1]} : vector<16x96xf32> to vector<16x32xf32>
    %cst_86 = arith.constant 0.353553385 : f32
    %145 = vector.broadcast %cst_86 : f32 to vector<16x32xf32>
    %146 = arith.mulf %144, %145 : vector<16x32xf32>
    %147 = vector.extract_strided_slice %143 {offsets = [0, 32], sizes = [16, 32], strides = [1, 1]} : vector<16x96xf32> to vector<16x32xf32>
    %148 = vector.extract_strided_slice %143 {offsets = [0, 64], sizes = [16, 32], strides = [1, 1]} : vector<16x96xf32> to vector<16x32xf32>
    %cst_87 = arith.constant dense<0.000000e+00> : vector<64x32xf32>
    %149 = tpu.matmul %4, %147, %cst_87 {dimension_numbers = #tpu.dot_dimension_numbers<[1], [0], [0], [1], [0, 0, 1, 1], [], []>} : vector<64x16xf32>, vector<16x32xf32>, vector<64x32xf32> -> vector<64x32xf32>
    %150 = arith.mulf %149, %5 : vector<64x32xf32>
    %cst_88 = arith.constant dense<0.000000e+00> : vector<64x32xf32>
    %151 = tpu.matmul %4, %148, %cst_88 {dimension_numbers = #tpu.dot_dimension_numbers<[1], [0], [0], [1], [0, 0, 1, 1], [], []>} : vector<64x16xf32>, vector<16x32xf32>, vector<64x32xf32> -> vector<64x32xf32>
    %152 = arith.mulf %151, %5 : vector<64x32xf32>
    "tpu.trace_start"() <{level = 10 : i32, message = "rd,cd->rc"}> : () -> ()
    %cst_89 = arith.constant dense<0.000000e+00> : vector<16x64xf32>
    %153 = tpu.matmul %146, %150, %cst_89 {dimension_numbers = #tpu.dot_dimension_numbers<[1], [1], [0], [0], [0, 0, 1, 0], [], []>} : vector<16x32xf32>, vector<64x32xf32>, vector<16x64xf32> -> vector<16x64xf32>
    "tpu.trace_stop"() : () -> ()
    %154 = arith.addf %153, %3 : vector<16x64xf32>
    %cst_90 = arith.constant dense<0xFF800000> : vector<16xf32>
    %155 = vector.multi_reduction <maximumf>, %154, %cst_90 [1] : vector<16x64xf32> to vector<16xf32>
    %156 = vector.shape_cast %155 : vector<16xf32> to vector<16x1xf32>
    %157 = vector.broadcast %156 : vector<16x1xf32> to vector<16x64xf32>
    %158 = arith.subf %154, %157 : vector<16x64xf32>
    %159 = math.exp %158 : vector<16x64xf32>
    %cst_91 = arith.constant dense<0.000000e+00> : vector<16x64xf32>
    %160 = tpu.matmul %159, %6, %cst_91 {dimension_numbers = #tpu.dot_dimension_numbers<[1], [0], [0], [1], [0, 0, 1, 1], [], []>} : vector<16x64xf32>, vector<64x64xf32>, vector<16x64xf32> -> vector<16x64xf32>
    %161 = tpu.reciprocal %160 {approx = true} : vector<16x64xf32> -> vector<16x64xf32>
    %162 = arith.mulf %159, %161 : vector<16x64xf32>
    %cst_92 = arith.constant dense<0.000000e+00> : vector<16x32xf32>
    %163 = tpu.matmul %162, %152, %cst_92 {dimension_numbers = #tpu.dot_dimension_numbers<[1], [0], [0], [1], [0, 0, 1, 1], [], []>} : vector<16x64xf32>, vector<64x32xf32>, vector<16x32xf32> -> vector<16x32xf32>
    %c1_93 = arith.constant 1 : index
    %c0_94 = arith.constant 0 : index
    %c0_95 = arith.constant 0 : index
    %164 = vector.load %arg11[%c1_93, %c0_94, %c0_95] : memref<2x32x32xf32, #tpu.memory_space<vmem>>, vector<1x32x32xf32>
    %165 = vector.shape_cast %164 : vector<1x32x32xf32> to vector<32x32xf32>
    %cst_96 = arith.constant dense<0.000000e+00> : vector<16x32xf32>
    %166 = tpu.matmul %163, %165, %cst_96 {dimension_numbers = #tpu.dot_dimension_numbers<[1], [0], [0], [1], [0, 0, 1, 1], [], []>} : vector<16x32xf32>, vector<32x32xf32>, vector<16x32xf32> -> vector<16x32xf32>
    %c1_97 = arith.constant 1 : index
    %c0_98 = arith.constant 0 : index
    %c0_99 = arith.constant 0 : index
    %167 = vector.load %arg12[%c1_97, %c0_98, %c0_99] : memref<2x1x32xf32, #tpu.memory_space<vmem>>, vector<1x1x32xf32>
    %168 = vector.shape_cast %167 : vector<1x1x32xf32> to vector<1x32xf32>
    %169 = vector.broadcast %168 : vector<1x32xf32> to vector<16x32xf32>
    %170 = arith.addf %166, %169 : vector<16x32xf32>
    %171 = arith.addf %112, %170 : vector<16x32xf32>
    %c1_100 = arith.constant 1 : index
    %c0_101 = arith.constant 0 : index
    %c0_102 = arith.constant 0 : index
    %172 = vector.load %arg13[%c1_100, %c0_101, %c0_102] : memref<2x1x32xf32, #tpu.memory_space<vmem>>, vector<1x1x32xf32>
    %173 = vector.shape_cast %172 : vector<1x1x32xf32> to vector<1x32xf32>
    %c1_103 = arith.constant 1 : index
    %c0_104 = arith.constant 0 : index
    %c0_105 = arith.constant 0 : index
    %174 = vector.load %arg14[%c1_103, %c0_104, %c0_105] : memref<2x1x32xf32, #tpu.memory_space<vmem>>, vector<1x1x32xf32>
    %175 = vector.shape_cast %174 : vector<1x1x32xf32> to vector<1x32xf32>
    %cst_106 = arith.constant dense<0.000000e+00> : vector<16xf32>
    %176 = vector.multi_reduction <add>, %171, %cst_106 [1] : vector<16x32xf32> to vector<16xf32>
    %177 = vector.shape_cast %176 : vector<16xf32> to vector<16x1xf32>
    %cst_107 = arith.constant 3.200000e+01 : f32
    %178 = vector.broadcast %cst_107 : f32 to vector<16x1xf32>
    %179 = arith.divf %177, %178 : vector<16x1xf32>
    %180 = vector.broadcast %179 : vector<16x1xf32> to vector<16x32xf32>
    %181 = arith.subf %171, %180 : vector<16x32xf32>
    %182 = arith.mulf %181, %181 : vector<16x32xf32>
    %cst_108 = arith.constant dense<0.000000e+00> : vector<16xf32>
    %183 = vector.multi_reduction <add>, %182, %cst_108 [1] : vector<16x32xf32> to vector<16xf32>
    %184 = vector.shape_cast %183 : vector<16xf32> to vector<16x1xf32>
    %cst_109 = arith.constant 3.200000e+01 : f32
    %185 = vector.broadcast %cst_109 : f32 to vector<16x1xf32>
    %186 = arith.divf %184, %185 : vector<16x1xf32>
    %cst_110 = arith.constant 9.99999974E-6 : f32
    %187 = vector.broadcast %cst_110 : f32 to vector<16x1xf32>
    %188 = arith.addf %186, %187 : vector<16x1xf32>
    %189 = math.rsqrt %188 : vector<16x1xf32>
    %190 = vector.broadcast %189 : vector<16x1xf32> to vector<16x32xf32>
    %191 = arith.mulf %181, %190 : vector<16x32xf32>
    %192 = vector.broadcast %173 : vector<1x32xf32> to vector<16x32xf32>
    %193 = arith.mulf %191, %192 : vector<16x32xf32>
    %194 = vector.broadcast %175 : vector<1x32xf32> to vector<16x32xf32>
    %195 = arith.addf %193, %194 : vector<16x32xf32>
    %c1_111 = arith.constant 1 : index
    %c0_112 = arith.constant 0 : index
    %c0_113 = arith.constant 0 : index
    %196 = vector.load %arg15[%c1_111, %c0_112, %c0_113] : memref<2x32x128xf32, #tpu.memory_space<vmem>>, vector<1x32x128xf32>
    %197 = vector.shape_cast %196 : vector<1x32x128xf32> to vector<32x128xf32>
    %cst_114 = arith.constant dense<0.000000e+00> : vector<16x128xf32>
    %198 = tpu.matmul %195, %197, %cst_114 {dimension_numbers = #tpu.dot_dimension_numbers<[1], [0], [0], [1], [0, 0, 1, 1], [], []>} : vector<16x32xf32>, vector<32x128xf32>, vector<16x128xf32> -> vector<16x128xf32>
    %c1_115 = arith.constant 1 : index
    %c0_116 = arith.constant 0 : index
    %c0_117 = arith.constant 0 : index
    %199 = vector.load %arg16[%c1_115, %c0_116, %c0_117] : memref<2x1x128xf32, #tpu.memory_space<vmem>>, vector<1x1x128xf32>
    %200 = vector.shape_cast %199 : vector<1x1x128xf32> to vector<1x128xf32>
    %201 = vector.broadcast %200 : vector<1x128xf32> to vector<16x128xf32>
    %202 = arith.addf %198, %201 : vector<16x128xf32>
    %cst_118 = arith.constant 1.702000e+00 : f32
    %203 = vector.broadcast %cst_118 : f32 to vector<16x128xf32>
    %204 = arith.mulf %203, %202 : vector<16x128xf32>
    %205 = arith.negf %204 : vector<16x128xf32>
    %206 = math.exp %205 : vector<16x128xf32>
    %cst_119 = arith.constant 1.000000e+00 : f32
    %207 = vector.broadcast %cst_119 : f32 to vector<16x128xf32>
    %208 = arith.addf %207, %206 : vector<16x128xf32>
    %209 = arith.divf %207, %208 : vector<16x128xf32>
    %210 = arith.mulf %202, %209 : vector<16x128xf32>
    %c1_120 = arith.constant 1 : index
    %c0_121 = arith.constant 0 : index
    %c0_122 = arith.constant 0 : index
    %211 = vector.load %arg17[%c1_120, %c0_121, %c0_122] : memref<2x128x32xf32, #tpu.memory_space<vmem>>, vector<1x128x32xf32>
    %212 = vector.shape_cast %211 : vector<1x128x32xf32> to vector<128x32xf32>
    %cst_123 = arith.constant dense<0.000000e+00> : vector<16x32xf32>
    %213 = tpu.matmul %210, %212, %cst_123 {dimension_numbers = #tpu.dot_dimension_numbers<[1], [0], [0], [1], [0, 0, 1, 1], [], []>} : vector<16x128xf32>, vector<128x32xf32>, vector<16x32xf32> -> vector<16x32xf32>
    %c1_124 = arith.constant 1 : index
    %c0_125 = arith.constant 0 : index
    %c0_126 = arith.constant 0 : index
    %214 = vector.load %arg18[%c1_124, %c0_125, %c0_126] : memref<2x1x32xf32, #tpu.memory_space<vmem>>, vector<1x1x32xf32>
    %215 = vector.shape_cast %214 : vector<1x1x32xf32> to vector<1x32xf32>
    %216 = vector.broadcast %215 : vector<1x32xf32> to vector<16x32xf32>
    %217 = arith.addf %213, %216 : vector<16x32xf32>
    %218 = arith.addf %171, %217 : vector<16x32xf32>
    %c0_127 = arith.constant 0 : index
    %c0_128 = arith.constant 0 : index
    %219 = vector.load %arg19[%c0_127, %c0_128] : memref<1x32xf32, #tpu.memory_space<vmem>>, vector<1x32xf32>
    %c0_129 = arith.constant 0 : index
    %c0_130 = arith.constant 0 : index
    %220 = vector.load %arg20[%c0_129, %c0_130] : memref<1x32xf32, #tpu.memory_space<vmem>>, vector<1x32xf32>
    %cst_131 = arith.constant dense<0.000000e+00> : vector<16xf32>
    %221 = vector.multi_reduction <add>, %218, %cst_131 [1] : vector<16x32xf32> to vector<16xf32>
    %222 = vector.shape_cast %221 : vector<16xf32> to vector<16x1xf32>
    %cst_132 = arith.constant 3.200000e+01 : f32
    %223 = vector.broadcast %cst_132 : f32 to vector<16x1xf32>
    %224 = arith.divf %222, %223 : vector<16x1xf32>
    %225 = vector.broadcast %224 : vector<16x1xf32> to vector<16x32xf32>
    %226 = arith.subf %218, %225 : vector<16x32xf32>
    %227 = arith.mulf %226, %226 : vector<16x32xf32>
    %cst_133 = arith.constant dense<0.000000e+00> : vector<16xf32>
    %228 = vector.multi_reduction <add>, %227, %cst_133 [1] : vector<16x32xf32> to vector<16xf32>
    %229 = vector.shape_cast %228 : vector<16xf32> to vector<16x1xf32>
    %cst_134 = arith.constant 3.200000e+01 : f32
    %230 = vector.broadcast %cst_134 : f32 to vector<16x1xf32>
    %231 = arith.divf %229, %230 : vector<16x1xf32>
    %cst_135 = arith.constant 9.99999974E-6 : f32
    %232 = vector.broadcast %cst_135 : f32 to vector<16x1xf32>
    %233 = arith.addf %231, %232 : vector<16x1xf32>
    %234 = math.rsqrt %233 : vector<16x1xf32>
    %235 = vector.broadcast %234 : vector<16x1xf32> to vector<16x32xf32>
    %236 = arith.mulf %226, %235 : vector<16x32xf32>
    %237 = vector.broadcast %219 : vector<1x32xf32> to vector<16x32xf32>
    %238 = arith.mulf %236, %237 : vector<16x32xf32>
    %239 = vector.broadcast %220 : vector<1x32xf32> to vector<16x32xf32>
    %240 = arith.addf %238, %239 : vector<16x32xf32>
    %c0_136 = arith.constant 0 : index
    %c0_137 = arith.constant 0 : index
    %241 = vector.load %arg6[%c0_136, %c0_137] : memref<8x16xf32, #tpu.memory_space<vmem>>, vector<8x16xf32>
    %cst_138 = arith.constant dense<0.000000e+00> : vector<8x32xf32>
    %242 = tpu.matmul %241, %240, %cst_138 {dimension_numbers = #tpu.dot_dimension_numbers<[1], [0], [0], [1], [0, 0, 1, 1], [], []>} : vector<8x16xf32>, vector<16x32xf32>, vector<8x32xf32> -> vector<8x32xf32>
    %c0_139 = arith.constant 0 : index
    %c0_140 = arith.constant 0 : index
    %243 = vector.load %arg21[%c0_139, %c0_140] : memref<32x128xf32, #tpu.memory_space<vmem>>, vector<32x128xf32>
    %cst_141 = arith.constant dense<0.000000e+00> : vector<8x128xf32>
    %244 = tpu.matmul %242, %243, %cst_141 {dimension_numbers = #tpu.dot_dimension_numbers<[1], [0], [0], [1], [0, 0, 1, 1], [], []>} : vector<8x32xf32>, vector<32x128xf32>, vector<8x128xf32> -> vector<8x128xf32>
    %c0_142 = arith.constant 0 : index
    %c0_143 = arith.constant 0 : index
    %245 = vector.load %arg22[%c0_142, %c0_143] : memref<8x128xf32, #tpu.memory_space<vmem>>, vector<8x128xf32>
    tpu.vector_store %arg22[%c0_142, %c0_143], %244 {strides = array<i32>} : memref<8x128xf32, #tpu.memory_space<vmem>>, vector<8x128xf32>,
    return
  }
}

</mosaic_0001>

<llo_original>
// kernel: text_encoder.1
$region0: #{text_encoder.1}
  #allocation0 [shape = 'u32[]', space=smem, size = 0x4, offset = 0x4, fixed_abs, tag = 'smem constant byte address 0x4 - core index']
  #allocation1 [shape = 'u32[144,128]{1,0:T(1,128)}', space=vmem, size = 0x12000, scoped, tag = 'internal scratch']
  %s0 = inlined_call_operand.vmem [shape: f32[16,32], index: 0, kind: input, shape index: {}]
  %s1 = inlined_call_operand.vmem [shape: f32[16,32], index: 1, kind: input, shape index: {}]
  %s2 = inlined_call_operand.vmem [shape: f32[16,64], index: 2, kind: input, shape index: {}]
  %s3 = inlined_call_operand.vmem [shape: f32[64,16], index: 3, kind: input, shape index: {}]
  %s4 = inlined_call_operand.vmem [shape: f32[64,32], index: 4, kind: input, shape index: {}]
  %s5 = inlined_call_operand.vmem [shape: f32[64,64], index: 5, kind: input, shape index: {}]
  %s6 = inlined_call_operand.vmem [shape: f32[8,16], index: 6, kind: input, shape index: {}]
  %s7 = inlined_call_operand.vmem [shape: f32[2,1,32], index: 7, kind: input, shape index: {}]
  %s8 = inlined_call_operand.vmem [shape: f32[2,1,32], index: 8, kind: input, shape index: {}]
  %s9 = inlined_call_operand.vmem [shape: f32[2,32,96], index: 9, kind: input, shape index: {}]
  %s10 = inlined_call_operand.vmem [shape: f32[2,1,96], index: 10, kind: input, shape index: {}]
  %s11 = inlined_call_operand.vmem [shape: f32[2,32,32], index: 11, kind: input, shape index: {}]
  %s12 = inlined_call_operand.vmem [shape: f32[2,1,32], index: 12, kind: input, shape index: {}]
  %s13 = inlined_call_operand.vmem [shape: f32[2,1,32], index: 13, kind: input, shape index: {}]
  %s14 = inlined_call_operand.vmem [shape: f32[2,1,32], index: 14, kind: input, shape index: {}]
  %s15 = inlined_call_operand.vmem [shape: f32[2,32,128], index: 15, kind: input, shape index: {}]
  %s16 = inlined_call_operand.vmem [shape: f32[2,1,128], index: 16, kind: input, shape index: {}]
  %s17 = inlined_call_operand.vmem [shape: f32[2,128,32], index: 17, kind: input, shape index: {}]
  %s18 = inlined_call_operand.vmem [shape: f32[2,1,32], index: 18, kind: input, shape index: {}]
  %s19 = inlined_call_operand.vmem [shape: f32[1,32], index: 19, kind: input, shape index: {}]
  %s20 = inlined_call_operand.vmem [shape: f32[1,32], index: 20, kind: input, shape index: {}]
  %s21 = inlined_call_operand.vmem [shape: f32[32,128], index: 21, kind: input, shape index: {}]
  %s22 = inlined_call_operand.vmem [shape: f32[8,128], index: 22, kind: output, shape index: {}]
  %s23 = sld [smem:[#allocation0]]
  $region98: #{text_encoder.1} parent=0
    _
  %s25 = ssub.s32 1, %s23
  %s26 = scalar_select 0, %s25, %s23
  // Predicated region
  $region2: #{text_encoder.1} parent=0 // pred_check
    _
  $region3: #{text_encoder.1} parent=0 // pred_check_branch
    %28 = sbr.rel (0) target = $region5
  $region4: #{text_encoder.1} parent=0 // pred_region
    _
  $region5: #{text_encoder.1} parent=0 // pred_fallthru
    _
  // Predicated region
  $region6: #{text_encoder.1} parent=0 // pred_check
    _
  $region7: #{text_encoder.1} parent=0 // pred_check_branch
    %30 = sbr.rel (0) target = $region9
  $region8: #{text_encoder.1} parent=0 // pred_region
    _
  $region9: #{text_encoder.1} parent=0 // pred_fallthru
    _
  // Predicated region
  $region10: #{text_encoder.1} parent=0 // pred_check
    _
  $region11: #{text_encoder.1} parent=0 // pred_check_branch
    %32 = sbr.rel (0) target = $region13
  $region12: #{text_encoder.1} parent=0 // pred_region
    _
  $region13: #{text_encoder.1} parent=0 // pred_fallthru
    _
  // Predicated region
  $region14: #{text_encoder.1} parent=0 // pred_check
    _
  $region15: #{text_encoder.1} parent=0 // pred_check_branch
    %34 = sbr.rel (0) target = $region17
  $region16: #{text_encoder.1} parent=0 // pred_region
    _
  $region17: #{text_encoder.1} parent=0 // pred_fallthru
    _
  // Predicated region
  $region18: #{text_encoder.1} parent=0 // pred_check
    _
  $region19: #{text_encoder.1} parent=0 // pred_check_branch
    %36 = sbr.rel (0) target = $region21
  $region20: #{text_encoder.1} parent=0 // pred_region
    _
  $region21: #{text_encoder.1} parent=0 // pred_fallthru
    _
  // Predicated region
  $region22: #{text_encoder.1} parent=0 // pred_check
    _
  $region23: #{text_encoder.1} parent=0 // pred_check_branch
    %38 = sbr.rel (0) target = $region25
  $region24: #{text_encoder.1} parent=0 // pred_region
    _
  $region25: #{text_encoder.1} parent=0 // pred_fallthru
    _
  // Predicated region
  $region26: #{text_encoder.1} parent=0 // pred_check
    _
  $region27: #{text_encoder.1} parent=0 // pred_check_branch
    %40 = sbr.rel (0) target = $region29
  $region28: #{text_encoder.1} parent=0 // pred_region
    _
  $region29: #{text_encoder.1} parent=0 // pred_fallthru
    _
  // Predicated region
  $region30: #{text_encoder.1} parent=0 // pred_check
    _
  $region31: #{text_encoder.1} parent=0 // pred_check_branch
    %42 = sbr.rel (0) target = $region33
  $region32: #{text_encoder.1} parent=0 // pred_region
    _
  $region33: #{text_encoder.1} parent=0 // pred_fallthru
    _
  // Predicated region
  $region34: #{text_encoder.1} parent=0 // pred_check
    _
  $region35: #{text_encoder.1} parent=0 // pred_check_branch
    %44 = sbr.rel (0) target = $region37
  $region36: #{text_encoder.1} parent=0 // pred_region
    _
  $region37: #{text_encoder.1} parent=0 // pred_fallthru
    _
  // Predicated region
  $region38: #{text_encoder.1} parent=0 // pred_check
    _
  $region39: #{text_encoder.1} parent=0 // pred_check_branch
    %46 = sbr.rel (0) target = $region41
  $region40: #{text_encoder.1} parent=0 // pred_region
    _
  $region41: #{text_encoder.1} parent=0 // pred_fallthru
    _
  // Predicated region
  $region42: #{text_encoder.1} parent=0 // pred_check
    _
  $region43: #{text_encoder.1} parent=0 // pred_check_branch
    %48 = sbr.rel (0) target = $region45
  $region44: #{text_encoder.1} parent=0 // pred_region
    _
  $region45: #{text_encoder.1} parent=0 // pred_fallthru
    _
  // Predicated region
  $region46: #{text_encoder.1} parent=0 // pred_check
    _
  $region47: #{text_encoder.1} parent=0 // pred_check_branch
    %50 = sbr.rel (0) target = $region49
  $region48: #{text_encoder.1} parent=0 // pred_region
    _
  $region49: #{text_encoder.1} parent=0 // pred_fallthru
    _
  // Predicated region
  $region50: #{text_encoder.1} parent=0 // pred_check
    _
  $region51: #{text_encoder.1} parent=0 // pred_check_branch
    %52 = sbr.rel (0) target = $region53
  $region52: #{text_encoder.1} parent=0 // pred_region
    _
  $region53: #{text_encoder.1} parent=0 // pred_fallthru
    _
  // Predicated region
  $region54: #{text_encoder.1} parent=0 // pred_check
    _
  $region55: #{text_encoder.1} parent=0 // pred_check_branch
    %54 = sbr.rel (0) target = $region57
  $region56: #{text_encoder.1} parent=0 // pred_region
    _
  $region57: #{text_encoder.1} parent=0 // pred_fallthru
    _
  // Predicated region
  $region58: #{text_encoder.1} parent=0 // pred_check
    _
  $region59: #{text_encoder.1} parent=0 // pred_check_branch
    %56 = sbr.rel (0) target = $region61
  $region60: #{text_encoder.1} parent=0 // pred_region
    _
  $region61: #{text_encoder.1} parent=0 // pred_fallthru
    _
  // Predicated region
  $region62: #{text_encoder.1} parent=0 // pred_check
    _
  $region63: #{text_encoder.1} parent=0 // pred_check_branch
    %58 = sbr.rel (0) target = $region65
  $region64: #{text_encoder.1} parent=0 // pred_region
    _
  $region65: #{text_encoder.1} parent=0 // pred_fallthru
    _
  // Predicated region
  $region66: #{text_encoder.1} parent=0 // pred_check
    _
  $region67: #{text_encoder.1} parent=0 // pred_check_branch
    %60 = sbr.rel (0) target = $region69
  $region68: #{text_encoder.1} parent=0 // pred_region
    _
  $region69: #{text_encoder.1} parent=0 // pred_fallthru
    _
  // Predicated region
  $region70: #{text_encoder.1} parent=0 // pred_check
    _
  $region71: #{text_encoder.1} parent=0 // pred_check_branch
    %62 = sbr.rel (0) target = $region73
  $region72: #{text_encoder.1} parent=0 // pred_region
    _
  $region73: #{text_encoder.1} parent=0 // pred_fallthru
    _
  // Predicated region
  $region74: #{text_encoder.1} parent=0 // pred_check
    _
  $region75: #{text_encoder.1} parent=0 // pred_check_branch
    %64 = sbr.rel (0) target = $region77
  $region76: #{text_encoder.1} parent=0 // pred_region
    _
  $region77: #{text_encoder.1} parent=0 // pred_fallthru
    _
  // Predicated region
  $region78: #{text_encoder.1} parent=0 // pred_check
    _
  $region79: #{text_encoder.1} parent=0 // pred_check_branch
    %66 = sbr.rel (0) target = $region81
  $region80: #{text_encoder.1} parent=0 // pred_region
    _
  $region81: #{text_encoder.1} parent=0 // pred_fallthru
    _
  // Predicated region
  $region82: #{text_encoder.1} parent=0 // pred_check
    _
  $region83: #{text_encoder.1} parent=0 // pred_check_branch
    %68 = sbr.rel (0) target = $region85
  $region84: #{text_encoder.1} parent=0 // pred_region
    _
  $region85: #{text_encoder.1} parent=0 // pred_fallthru
    _
  // Predicated region
  $region86: #{text_encoder.1} parent=0 // pred_check
    _
  $region87: #{text_encoder.1} parent=0 // pred_check_branch
    %70 = sbr.rel (0) target = $region89
  $region88: #{text_encoder.1} parent=0 // pred_region
    _
  $region89: #{text_encoder.1} parent=0 // pred_fallthru
    _
  %v71 = vld [vmem:[%s0] sm:$0xff]
  %v72 = vld [vmem:[%s0 + $0x8] sm:$0xff]
  %v73 = vld [vmem:[%s1] sm:$0xff]
  %v74 = vld [vmem:[%s1 + $0x8] sm:$0xff]
  %v75 = vadd.f32 %v71, %v73
  %v76 = vadd.f32 %v72, %v74
  %v77 = vld [vmem:[%s2] sm:$0xff]
  %v78 = vld [vmem:[%s2 + $0x8] sm:$0xff]
  %v79 = vld [vmem:[%s3] sm:$0xff]
  %v80 = vld [vmem:[%s3 + $0x8] sm:$0xff]
  %v81 = vld [vmem:[%s3 + $0x10] sm:$0xff]
  %v82 = vld [vmem:[%s3 + $0x18] sm:$0xff]
  %v83 = vld [vmem:[%s3 + $0x20] sm:$0xff]
  %v84 = vld [vmem:[%s3 + $0x28] sm:$0xff]
  %v85 = vld [vmem:[%s3 + $0x30] sm:$0xff]
  %v86 = vld [vmem:[%s3 + $0x38] sm:$0xff]
  %v87 = vld [vmem:[%s4] sm:$0xff]
  %v88 = vld [vmem:[%s4 + $0x8] sm:$0xff]
  %v89 = vld [vmem:[%s4 + $0x10] sm:$0xff]
  %v90 = vld [vmem:[%s4 + $0x18] sm:$0xff]
  %v91 = vld [vmem:[%s4 + $0x20] sm:$0xff]
  %v92 = vld [vmem:[%s4 + $0x28] sm:$0xff]
  %v93 = vld [vmem:[%s4 + $0x30] sm:$0xff]
  %v94 = vld [vmem:[%s4 + $0x38] sm:$0xff]
  %v95 = vld [vmem:[%s5] sm:$0xff]
  %v96 = vld [vmem:[%s5 + $0x8] sm:$0xff]
  %v97 = vld [vmem:[%s5 + $0x10] sm:$0xff]
  %v98 = vld [vmem:[%s5 + $0x18] sm:$0xff]
  %v99 = vld [vmem:[%s5 + $0x20] sm:$0xff]
  %v100 = vld [vmem:[%s5 + $0x28] sm:$0xff]
  %v101 = vld [vmem:[%s5 + $0x30] sm:$0xff]
  %v102 = vld [vmem:[%s5 + $0x38] sm:$0xff]
  %v103 = vld [vmem:[%s7] sm:$0x1]
  %v104 = vld [vmem:[%s8] sm:$0x1]
  %vm105 = vcmask 261120
  %v106 = vsel %vm105, %v75, 0.0
  %107 = vadd.xlane.f32.xlu0 %v106
  %v108 = vpop.xlane.xlu0 %107
  %v109 = vsel %vm105, %v76, 0.0
  %110 = vadd.xlane.f32.xlu0 %v109
  %v111 = vpop.xlane.xlu0 %110
  %v112 = vrcp.pop 32.0
  %v113 = vmul.f32 %v108, %v112
  %v114 = vmul.f32 %v111, %v112
  %v115 = vsub.f32 %v75, %v113
  %v116 = vsub.f32 %v76, %v114
  %v117 = vmul.f32 %v115, %v115
  %v118 = vmul.f32 %v116, %v116
  %v119 = vsel %vm105, %v117, 0.0
  %120 = vadd.xlane.f32.xlu0 %v119
  %v121 = vpop.xlane.xlu0 %120
  %v122 = vsel %vm105, %v118, 0.0
  %123 = vadd.xlane.f32.xlu0 %v122
  %v124 = vpop.xlane.xlu0 %123
  %v125 = vmul.f32 %v121, %v112
  %v126 = vmul.f32 %v124, %v112
  %v127 = vadd.f32 %v125, 1e-05
  %v128 = vadd.f32 %v126, 1e-05
  %v129 = vrsqrt.pop %v127
  %v130 = vrsqrt.pop %v128
  %v131 = vmul.f32 %v115, %v129
  %v132 = vmul.f32 %v116, %v130
  %v134 = vlaneseq
  %v135 = vshrl.u32 %v134, 7
  %v136 = vsub.s32 0, %v135
  %v137 = vrot.slane %v103, %v136
  %v139 = vmul.f32 %v131, %v137
  %v140 = vmul.f32 %v132, %v137
  %v142 = vlaneseq
  %v143 = vshrl.u32 %v142, 7
  %v144 = vsub.s32 0, %v143
  %v145 = vrot.slane %v104, %v144
  %v147 = vadd.f32 %v139, %v145
  %v148 = vadd.f32 %v140, %v145
  %v149 = vld [vmem:[%s9] sm:$0xff]
  %v150 = vld [vmem:[%s9 + $0x8] sm:$0xff]
  %v151 = vld [vmem:[%s9 + $0x10] sm:$0xff]
  %v152 = vld [vmem:[%s9 + $0x18] sm:$0xff]
  %v153 = vld [vmem:[%s10] sm:$0x1]
  %v155 = vlaneseq
  %v156 = vshrl.u32 %v155, 7
  %v157 = vsub.s32 0, %v156
  %v158 = vrot.slane %v153, %v157
  %v161 = vsel %vm105, %v147, 0
  %v164 = vsel %vm105, %v148, 0
  %166 = vmatprep.subr.mxu0 0.0
  %167 = vmatpush1.msra.mxu0 %v149
  %168 = vmatprep.subr.mxu0 0.0
  %169 = vmatpush1.msra.mxu0 %v150
  %170 = vmatprep.subr.mxu0 0.0
  %171 = vmatpush1.msra.mxu0 %v151
  %172 = vmatprep.subr.mxu0 0.0
  %173 = vmatpush1.msra.mxu0 %v152
  %174 = vmatprep.subr.mxu0 0.0
  %175 = vmatpush1.msra.mxu0 0.0
  %176 = vmatprep.subr.mxu0 0.0
  %177 = vmatpush1.msra.mxu0 0.0
  %178 = vmatprep.subr.mxu0 0.0
  %179 = vmatpush1.msra.mxu0 0.0
  %180 = vmatprep.subr.mxu0 0.0
  %181 = vmatpush1.msra.mxu0 0.0
  %182 = vmatprep.subr.mxu0 0.0
  %183 = vmatpush1.msra.mxu0 0.0
  %184 = vmatprep.subr.mxu0 0.0
  %185 = vmatpush1.msra.mxu0 0.0
  %186 = vmatprep.subr.mxu0 0.0
  %187 = vmatpush1.msra.mxu0 0.0
  %188 = vmatprep.subr.mxu0 0.0
  %189 = vmatpush1.msra.mxu0 0.0
  %190 = vmatprep.subr.mxu0 0.0
  %191 = vmatpush1.msra.mxu0 0.0
  %192 = vmatprep.subr.mxu0 0.0
  %193 = vmatpush1.msra.mxu0 0.0
  %194 = vmatprep.subr.mxu0 0.0
  %195 = vmatpush1.msra.mxu0 0.0
  %196 = vmatprep.subr.mxu0 0.0
  %197 = vmatpush1.msra.mxu0 0.0
  %198 = vmatprep.subr.mxu0 0.0
  %199 = vmatpush1.msra.mxu0 0.0
  %200 = vmatprep.subr.mxu0 0.0
  %201 = vmatpush1.msra.mxu0 0.0
  %202 = vmatprep.subr.mxu0 0.0
  %203 = vmatpush1.msra.mxu0 0.0
  %204 = vmatprep.subr.mxu0 0.0
  %205 = vmatpush1.msra.mxu0 0.0
  %206 = vmatprep.subr.mxu0 0.0
  %207 = vmatpush1.msra.mxu0 0.0
  %208 = vmatprep.subr.mxu0 0.0
  %209 = vmatpush1.msra.mxu0 0.0
  %210 = vmatprep.subr.mxu0 0.0
  %211 = vmatpush1.msra.mxu0 0.0
  %212 = vmatprep.subr.mxu0 0.0
  %213 = vmatpush1.msra.mxu0 0.0
  %214 = vmatprep.subr.mxu0 0.0
  %215 = vmatpush1.msra.mxu0 0.0
  %216 = vmatprep.subr.mxu0 0.0
  %217 = vmatpush1.msra.mxu0 0.0
  %218 = vmatprep.subr.mxu0 0.0
  %219 = vmatpush1.msra.mxu0 0.0
  %220 = vmatprep.subr.mxu0 0.0
  %221 = vmatpush1.msra.mxu0 0.0
  %222 = vmatprep.subr.mxu0 0.0
  %223 = vmatpush1.msra.mxu0 0.0
  %224 = vmatprep.subr.mxu0 0.0
  %225 = vmatpush1.msra.mxu0 0.0
  %226 = vmatprep.subr.mxu0 0.0
  %227 = vmatpush1.msra.mxu0 0.0
  %228 = vmatprep.subr.mxu0 0.0
  %229 = vmatpush1.msra.mxu0 0.0
  %230 = vmatprep.mubr.f32.mxu0 0.0
  %231 = vmatmul.mubr.f32.gmra.mrb[0].mxu0 %v161
  %v232 = vpop.f32.mrb[0].mxu0
  %v233 = vadd.f32 %v158, %v232
  %v234 = vpop.f32.mrb[0].mxu0
  %235 = vmatprep.mubr.f32.mxu0 0.0
  %236 = vmatmul.mubr.f32.gmra.mrb[0].mxu0 %v164
  %v237 = vpop.f32.mrb[0].mxu0
  %v238 = vadd.f32 %v158, %v237
  %v239 = vpop.f32.mrb[0].mxu0
  %240 = vdwg.mxu0
  %v241 = vmul.f32 %v233, 0.35355338
  %v242 = vmul.f32 %v238, 0.35355338
  %245 = vrot.lane.b32.xlu0 %v233, 96
  %v246 = vpop.permute.xlu0 %245
  %247 = vrot.lane.b32.xlu0 %v238, 96
  %v248 = vpop.permute.xlu0 %247
  %vm251 = vcmask 130048
  %v253 = vsel %vm251, %v79, 0
  %v256 = vsel %vm251, %v80, 0
  %v259 = vsel %vm251, %v81, 0
  %v262 = vsel %vm251, %v82, 0
  %v265 = vsel %vm251, %v83, 0
  %v268 = vsel %vm251, %v84, 0
  %v271 = vsel %vm251, %v85, 0
  %v274 = vsel %vm251, %v86, 0
  %276 = vmatprep.subr.mxu0 0.0
  %277 = vmatpush1.msra.mxu0 %v246
  %278 = vmatprep.subr.mxu0 0.0
  %279 = vmatpush1.msra.mxu0 %v248
  %280 = vmatprep.subr.mxu0 0.0
  %281 = vmatpush1.msra.mxu0 0.0
  %282 = vmatprep.subr.mxu0 0.0
  %283 = vmatpush1.msra.mxu0 0.0
  %284 = vmatprep.subr.mxu0 0.0
  %285 = vmatpush1.msra.mxu0 0.0
  %286 = vmatprep.subr.mxu0 0.0
  %287 = vmatpush1.msra.mxu0 0.0
  %288 = vmatprep.subr.mxu0 0.0
  %289 = vmatpush1.msra.mxu0 0.0
  %290 = vmatprep.subr.mxu0 0.0
  %291 = vmatpush1.msra.mxu0 0.0
  %292 = vmatprep.subr.mxu0 0.0
  %293 = vmatpush1.msra.mxu0 0.0
  %294 = vmatprep.subr.mxu0 0.0
  %295 = vmatpush1.msra.mxu0 0.0
  %296 = vmatprep.subr.mxu0 0.0
  %297 = vmatpush1.msra.mxu0 0.0
  %298 = vmatprep.subr.mxu0 0.0
  %299 = vmatpush1.msra.mxu0 0.0
  %300 = vmatprep.subr.mxu0 0.0
  %301 = vmatpush1.msra.mxu0 0.0
  %302 = vmatprep.subr.mxu0 0.0
  %303 = vmatpush1.msra.mxu0 0.0
  %304 = vmatprep.subr.mxu0 0.0
  %305 = vmatpush1.msra.mxu0 0.0
  %306 = vmatprep.subr.mxu0 0.0
  %307 = vmatpush1.msra.mxu0 0.0
  %308 = vmatprep.subr.mxu0 0.0
  %309 = vmatpush1.msra.mxu0 0.0
  %310 = vmatprep.subr.mxu0 0.0
  %311 = vmatpush1.msra.mxu0 0.0
  %312 = vmatprep.subr.mxu0 0.0
  %313 = vmatpush1.msra.mxu0 0.0
  %314 = vmatprep.subr.mxu0 0.0
  %315 = vmatpush1.msra.mxu0 0.0
  %316 = vmatprep.subr.mxu0 0.0
  %317 = vmatpush1.msra.mxu0 0.0
  %318 = vmatprep.subr.mxu0 0.0
  %319 = vmatpush1.msra.mxu0 0.0
  %320 = vmatprep.subr.mxu0 0.0
  %321 = vmatpush1.msra.mxu0 0.0
  %322 = vmatprep.subr.mxu0 0.0
  %323 = vmatpush1.msra.mxu0 0.0
  %324 = vmatprep.subr.mxu0 0.0
  %325 = vmatpush1.msra.mxu0 0.0
  %326 = vmatprep.subr.mxu0 0.0
  %327 = vmatpush1.msra.mxu0 0.0
  %328 = vmatprep.subr.mxu0 0.0
  %329 = vmatpush1.msra.mxu0 0.0
  %330 = vmatprep.subr.mxu0 0.0
  %331 = vmatpush1.msra.mxu0 0.0
  %332 = vmatprep.subr.mxu0 0.0
  %333 = vmatpush1.msra.mxu0 0.0
  %334 = vmatprep.subr.mxu0 0.0
  %335 = vmatpush1.msra.mxu0 0.0
  %336 = vmatprep.subr.mxu0 0.0
  %337 = vmatpush1.msra.mxu0 0.0
  %338 = vmatprep.subr.mxu0 0.0
  %339 = vmatpush1.msra.mxu0 0.0
  %340 = vmatprep.mubr.f32.mxu0 0.0
  %341 = vmatmul.mubr.f32.gmra.mrb[0].mxu0 %v253
  %v342 = vpop.f32.mrb[0].mxu0
  %v343 = vadd.f32 0.0, %v342
  %v344 = vpop.f32.mrb[0].mxu0
  %345 = vmatprep.mubr.f32.mxu0 0.0
  %346 = vmatmul.mubr.f32.gmra.mrb[0].mxu0 %v256
  %v347 = vpop.f32.mrb[0].mxu0
  %v348 = vadd.f32 0.0, %v347
  %v349 = vpop.f32.mrb[0].mxu0
  %350 = vmatprep.mubr.f32.mxu0 0.0
  %351 = vmatmul.mubr.f32.gmra.mrb[0].mxu0 %v259
  %v352 = vpop.f32.mrb[0].mxu0
  %v353 = vadd.f32 0.0, %v352
  %v354 = vpop.f32.mrb[0].mxu0
  %355 = vmatprep.mubr.f32.mxu0 0.0
  %356 = vmatmul.mubr.f32.gmra.mrb[0].mxu0 %v262
  %v357 = vpop.f32.mrb[0].mxu0
  %v358 = vadd.f32 0.0, %v357
  %v359 = vpop.f32.mrb[0].mxu0
  %360 = vmatprep.mubr.f32.mxu0 0.0
  %361 = vmatmul.mubr.f32.gmra.mrb[0].mxu0 %v265
  %v362 = vpop.f32.mrb[0].mxu0
  %v363 = vadd.f32 0.0, %v362
  %v364 = vpop.f32.mrb[0].mxu0
  %365 = vmatprep.mubr.f32.mxu0 0.0
  %366 = vmatmul.mubr.f32.gmra.mrb[0].mxu0 %v268
  %v367 = vpop.f32.mrb[0].mxu0
  %v368 = vadd.f32 0.0, %v367
  %v369 = vpop.f32.mrb[0].mxu0
  %370 = vmatprep.mubr.f32.mxu0 0.0
  %371 = vmatmul.mubr.f32.gmra.mrb[0].mxu0 %v271
  %v372 = vpop.f32.mrb[0].mxu0
  %v373 = vadd.f32 0.0, %v372
  %v374 = vpop.f32.mrb[0].mxu0
  %375 = vmatprep.mubr.f32.mxu0 0.0
  %376 = vmatmul.mubr.f32.gmra.mrb[0].mxu0 %v274
  %v377 = vpop.f32.mrb[0].mxu0
  %v378 = vadd.f32 0.0, %v377
  %v379 = vpop.f32.mrb[0].mxu0
  %380 = vdwg.mxu0
  %v381 = vmul.f32 %v343, %v87
  %v382 = vmul.f32 %v348, %v88
  %v383 = vmul.f32 %v353, %v89
  %v384 = vmul.f32 %v358, %v90
  %v385 = vmul.f32 %v363, %v91
  %v386 = vmul.f32 %v368, %v92
  %v387 = vmul.f32 %v373, %v93
  %v388 = vmul.f32 %v378, %v94
  %389 = vrot.lane.b32.xlu0 %v233, 64
  %v390 = vpop.permute.xlu0 %389
  %391 = vrot.lane.b32.xlu0 %v238, 64
  %v392 = vpop.permute.xlu0 %391
  %395 = vmatprep.subr.mxu0 0.0
  %396 = vmatpush1.msra.mxu0 %v390
  %397 = vmatprep.subr.mxu0 0.0
  %398 = vmatpush1.msra.mxu0 %v392
  %399 = vmatprep.subr.mxu0 0.0
  %400 = vmatpush1.msra.mxu0 0.0
  %401 = vmatprep.subr.mxu0 0.0
  %402 = vmatpush1.msra.mxu0 0.0
  %403 = vmatprep.subr.mxu0 0.0
  %404 = vmatpush1.msra.mxu0 0.0
  %405 = vmatprep.subr.mxu0 0.0
  %406 = vmatpush1.msra.mxu0 0.0
  %407 = vmatprep.subr.mxu0 0.0
  %408 = vmatpush1.msra.mxu0 0.0
  %409 = vmatprep.subr.mxu0 0.0
  %410 = vmatpush1.msra.mxu0 0.0
  %411 = vmatprep.subr.mxu0 0.0
  %412 = vmatpush1.msra.mxu0 0.0
  %413 = vmatprep.subr.mxu0 0.0
  %414 = vmatpush1.msra.mxu0 0.0
  %415 = vmatprep.subr.mxu0 0.0
  %416 = vmatpush1.msra.mxu0 0.0
  %417 = vmatprep.subr.mxu0 0.0
  %418 = vmatpush1.msra.mxu0 0.0
  %419 = vmatprep.subr.mxu0 0.0
  %420 = vmatpush1.msra.mxu0 0.0
  %421 = vmatprep.subr.mxu0 0.0
  %422 = vmatpush1.msra.mxu0 0.0
  %423 = vmatprep.subr.mxu0 0.0
  %424 = vmatpush1.msra.mxu0 0.0
  %425 = vmatprep.subr.mxu0 0.0
  %426 = vmatpush1.msra.mxu0 0.0
  %427 = vmatprep.subr.mxu0 0.0
  %428 = vmatpush1.msra.mxu0 0.0
  %429 = vmatprep.subr.mxu0 0.0
  %430 = vmatpush1.msra.mxu0 0.0
  %431 = vmatprep.subr.mxu0 0.0
  %432 = vmatpush1.msra.mxu0 0.0
  %433 = vmatprep.subr.mxu0 0.0
  %434 = vmatpush1.msra.mxu0 0.0
  %435 = vmatprep.subr.mxu0 0.0
  %436 = vmatpush1.msra.mxu0 0.0
  %437 = vmatprep.subr.mxu0 0.0
  %438 = vmatpush1.msra.mxu0 0.0
  %439 = vmatprep.subr.mxu0 0.0
  %440 = vmatpush1.msra.mxu0 0.0
  %441 = vmatprep.subr.mxu0 0.0
  %442 = vmatpush1.msra.mxu0 0.0
  %443 = vmatprep.subr.mxu0 0.0
  %444 = vmatpush1.msra.mxu0 0.0
  %445 = vmatprep.subr.mxu0 0.0
  %446 = vmatpush1.msra.mxu0 0.0
  %447 = vmatprep.subr.mxu0 0.0
  %448 = vmatpush1.msra.mxu0 0.0
  %449 = vmatprep.subr.mxu0 0.0
  %450 = vmatpush1.msra.mxu0 0.0
  %451 = vmatprep.subr.mxu0 0.0
  %452 = vmatpush1.msra.mxu0 0.0
  %453 = vmatprep.subr.mxu0 0.0
  %454 = vmatpush1.msra.mxu0 0.0
  %455 = vmatprep.subr.mxu0 0.0
  %456 = vmatpush1.msra.mxu0 0.0
  %457 = vmatprep.subr.mxu0 0.0
  %458 = vmatpush1.msra.mxu0 0.0
  %459 = vmatprep.mubr.f32.mxu0 0.0
  %460 = vmatmul.mubr.f32.gmra.mrb[0].mxu0 %v253
  %v461 = vpop.f32.mrb[0].mxu0
  %v462 = vadd.f32 0.0, %v461
  %v463 = vpop.f32.mrb[0].mxu0
  %464 = vmatprep.mubr.f32.mxu0 0.0
  %465 = vmatmul.mubr.f32.gmra.mrb[0].mxu0 %v256
  %v466 = vpop.f32.mrb[0].mxu0
  %v467 = vadd.f32 0.0, %v466
  %v468 = vpop.f32.mrb[0].mxu0
  %469 = vmatprep.mubr.f32.mxu0 0.0
  %470 = vmatmul.mubr.f32.gmra.mrb[0].mxu0 %v259
  %v471 = vpop.f32.mrb[0].mxu0
  %v472 = vadd.f32 0.0, %v471
  %v473 = vpop.f32.mrb[0].mxu0
  %474 = vmatprep.mubr.f32.mxu0 0.0
  %475 = vmatmul.mubr.f32.gmra.mrb[0].mxu0 %v262
  %v476 = vpop.f32.mrb[0].mxu0
  %v477 = vadd.f32 0.0, %v476
  %v478 = vpop.f32.mrb[0].mxu0
  %479 = vmatprep.mubr.f32.mxu0 0.0
  %480 = vmatmul.mubr.f32.gmra.mrb[0].mxu0 %v265
  %v481 = vpop.f32.mrb[0].mxu0
  %v482 = vadd.f32 0.0, %v481
  %v483 = vpop.f32.mrb[0].mxu0
  %484 = vmatprep.mubr.f32.mxu0 0.0
  %485 = vmatmul.mubr.f32.gmra.mrb[0].mxu0 %v268
  %v486 = vpop.f32.mrb[0].mxu0
  %v487 = vadd.f32 0.0, %v486
  %v488 = vpop.f32.mrb[0].mxu0
  %489 = vmatprep.mubr.f32.mxu0 0.0
  %490 = vmatmul.mubr.f32.gmra.mrb[0].mxu0 %v271
  %v491 = vpop.f32.mrb[0].mxu0
  %v492 = vadd.f32 0.0, %v491
  %v493 = vpop.f32.mrb[0].mxu0
  %494 = vmatprep.mubr.f32.mxu0 0.0
  %495 = vmatmul.mubr.f32.gmra.mrb[0].mxu0 %v274
  %v496 = vpop.f32.mrb[0].mxu0
  %v497 = vadd.f32 0.0, %v496
  %v498 = vpop.f32.mrb[0].mxu0
  %499 = vdwg.mxu0
  %v500 = vmul.f32 %v462, %v87
  %v501 = vmul.f32 %v467, %v88
  %v502 = vmul.f32 %v472, %v89
  %v503 = vmul.f32 %v477, %v90
  %v504 = vmul.f32 %v482, %v91
  %v505 = vmul.f32 %v487, %v92
  %v506 = vmul.f32 %v492, %v93
  %v507 = vmul.f32 %v497, %v94
  %v509 = vsel %vm105, %v241, 0
  %v512 = vsel %vm105, %v242, 0
  %v515 = vsel %vm105, %v381, 0
  %v518 = vsel %vm105, %v382, 0
  %v521 = vsel %vm105, %v383, 0
  %v524 = vsel %vm105, %v384, 0
  %v527 = vsel %vm105, %v385, 0
  %v530 = vsel %vm105, %v386, 0
  %v533 = vsel %vm105, %v387, 0
  %v536 = vsel %vm105, %v388, 0
  %538 = vmatprep.subr.mxu0 0.0
  %539 = vmatpush1.xpose.msra.mxu0 %v515
  %540 = vmatprep.subr.mxu0 0.0
  %541 = vmatpush1.xpose.msra.mxu0 %v518
  %542 = vmatprep.subr.mxu0 0.0
  %543 = vmatpush1.xpose.msra.mxu0 %v521
  %544 = vmatprep.subr.mxu0 0.0
  %545 = vmatpush1.xpose.msra.mxu0 %v524
  %546 = vmatprep.subr.mxu0 0.0
  %547 = vmatpush1.xpose.msra.mxu0 %v527
  %548 = vmatprep.subr.mxu0 0.0
  %549 = vmatpush1.xpose.msra.mxu0 %v530
  %550 = vmatprep.subr.mxu0 0.0
  %551 = vmatpush1.xpose.msra.mxu0 %v533
  %552 = vmatprep.subr.mxu0 0.0
  %553 = vmatpush1.xpose.msra.mxu0 %v536
  %554 = vmatprep.subr.mxu0 0.0
  %555 = vmatpush1.xpose.msra.mxu0 0.0
  %556 = vmatprep.subr.mxu0 0.0
  %557 = vmatpush1.xpose.msra.mxu0 0.0
  %558 = vmatprep.subr.mxu0 0.0
  %559 = vmatpush1.xpose.msra.mxu0 0.0
  %560 = vmatprep.subr.mxu0 0.0
  %561 = vmatpush1.xpose.msra.mxu0 0.0
  %562 = vmatprep.subr.mxu0 0.0
  %563 = vmatpush1.xpose.msra.mxu0 0.0
  %564 = vmatprep.subr.mxu0 0.0
  %565 = vmatpush1.xpose.msra.mxu0 0.0
  %566 = vmatprep.subr.mxu0 0.0
  %567 = vmatpush1.xpose.msra.mxu0 0.0
  %568 = vmatprep.subr.mxu0 0.0
  %569 = vmatpush1.xpose.msra.mxu0 0.0
  %570 = vmatprep.subr.mxu0 0.0
  %571 = vmatpush1.xpose.msra.mxu0 0.0
  %572 = vmatprep.subr.mxu0 0.0
  %573 = vmatpush1.xpose.msra.mxu0 0.0
  %574 = vmatprep.subr.mxu0 0.0
  %575 = vmatpush1.xpose.msra.mxu0 0.0
  %576 = vmatprep.subr.mxu0 0.0
  %577 = vmatpush1.xpose.msra.mxu0 0.0
  %578 = vmatprep.subr.mxu0 0.0
  %579 = vmatpush1.xpose.msra.mxu0 0.0
  %580 = vmatprep.subr.mxu0 0.0
  %581 = vmatpush1.xpose.msra.mxu0 0.0
  %582 = vmatprep.subr.mxu0 0.0
  %583 = vmatpush1.xpose.msra.mxu0 0.0
  %584 = vmatprep.subr.mxu0 0.0
  %585 = vmatpush1.xpose.msra.mxu0 0.0
  %586 = vmatprep.subr.mxu0 0.0
  %587 = vmatpush1.xpose.msra.mxu0 0.0
  %588 = vmatprep.subr.mxu0 0.0
  %589 = vmatpush1.xpose.msra.mxu0 0.0
  %590 = vmatprep.subr.mxu0 0.0
  %591 = vmatpush1.xpose.msra.mxu0 0.0
  %592 = vmatprep.subr.mxu0 0.0
  %593 = vmatpush1.xpose.msra.mxu0 0.0
  %594 = vmatprep.subr.mxu0 0.0
  %595 = vmatpush1.xpose.msra.mxu0 0.0
  %596 = vmatprep.subr.mxu0 0.0
  %597 = vmatpush1.xpose.msra.mxu0 0.0
  %598 = vmatprep.subr.mxu0 0.0
  %599 = vmatpush1.xpose.msra.mxu0 0.0
  %600 = vmatprep.subr.mxu0 0.0
  %601 = vmatpush1.xpose.msra.mxu0 0.0
  %602 = vmatprep.mubr.f32.mxu0 0.0
  %603 = vmatmul.mubr.f32.gmra.mrb[0].mxu0 %v509
  %v604 = vpop.f32.mrb[0].mxu0
  %v605 = vadd.f32 %v77, %v604
  %v606 = vpop.f32.mrb[0].mxu0
  %607 = vmatprep.mubr.f32.mxu0 0.0
  %608 = vmatmul.mubr.f32.gmra.mrb[0].mxu0 %v512
  %v609 = vpop.f32.mrb[0].mxu0
  %v610 = vadd.f32 %v78, %v609
  %v611 = vpop.f32.mrb[0].mxu0
  %612 = vdwg.mxu0
  %vm613 = vcmask 523264
  %v614 = vsel %vm613, %v605, -inf
  %615 = vmax.xlane.f32.xlu0 %v614
  %v616 = vpop.xlane.xlu0 %615
  %v617 = vsel %vm613, %v610, -inf
  %618 = vmax.xlane.f32.xlu0 %v617
  %v619 = vpop.xlane.xlu0 %618
  %v620 = vsub.f32 %v605, %v616
  %v621 = vsub.f32 %v610, %v619
  %v622 = vmul.f32 %v620, 1.442695
  %v623 = vpow.pop %v622
  %v624 = vmul.f32 %v621, 1.442695
  %v625 = vpow.pop %v624
  %v627 = vsel %vm613, %v623, 0
  %v630 = vsel %vm613, %v625, 0
  %632 = vmatprep.subr.mxu0 0.0
  %633 = vmatpush1.msra.mxu0 %v95
  %634 = vmatprep.subr.mxu0 0.0
  %635 = vmatpush1.msra.mxu0 %v96
  %636 = vmatprep.subr.mxu0 0.0
  %637 = vmatpush1.msra.mxu0 %v97
  %638 = vmatprep.subr.mxu0 0.0
  %639 = vmatpush1.msra.mxu0 %v98
  %640 = vmatprep.subr.mxu0 0.0
  %641 = vmatpush1.msra.mxu0 %v99
  %642 = vmatprep.subr.mxu0 0.0
  %643 = vmatpush1.msra.mxu0 %v100
  %644 = vmatprep.subr.mxu0 0.0
  %645 = vmatpush1.msra.mxu0 %v101
  %646 = vmatprep.subr.mxu0 0.0
  %647 = vmatpush1.msra.mxu0 %v102
  %648 = vmatprep.subr.mxu0 0.0
  %649 = vmatpush1.msra.mxu0 0.0
  %650 = vmatprep.subr.mxu0 0.0
  %651 = vmatpush1.msra.mxu0 0.0
  %652 = vmatprep.subr.mxu0 0.0
  %653 = vmatpush1.msra.mxu0 0.0
  %654 = vmatprep.subr.mxu0 0.0
  %655 = vmatpush1.msra.mxu0 0.0
  %656 = vmatprep.subr.mxu0 0.0
  %657 = vmatpush1.msra.mxu0 0.0
  %658 = vmatprep.subr.mxu0 0.0
  %659 = vmatpush1.msra.mxu0 0.0
  %660 = vmatprep.subr.mxu0 0.0
  %661 = vmatpush1.msra.mxu0 0.0
  %662 = vmatprep.subr.mxu0 0.0
  %663 = vmatpush1.msra.mxu0 0.0
  %664 = vmatprep.subr.mxu0 0.0
  %665 = vmatpush1.msra.mxu0 0.0
  %666 = vmatprep.subr.mxu0 0.0
  %667 = vmatpush1.msra.mxu0 0.0
  %668 = vmatprep.subr.mxu0 0.0
  %669 = vmatpush1.msra.mxu0 0.0
  %670 = vmatprep.subr.mxu0 0.0
  %671 = vmatpush1.msra.mxu0 0.0
  %672 = vmatprep.subr.mxu0 0.0
  %673 = vmatpush1.msra.mxu0 0.0
  %674 = vmatprep.subr.mxu0 0.0
  %675 = vmatpush1.msra.mxu0 0.0
  %676 = vmatprep.subr.mxu0 0.0
  %677 = vmatpush1.msra.mxu0 0.0
  %678 = vmatprep.subr.mxu0 0.0
  %679 = vmatpush1.msra.mxu0 0.0
  %680 = vmatprep.subr.mxu0 0.0
  %681 = vmatpush1.msra.mxu0 0.0
  %682 = vmatprep.subr.mxu0 0.0
  %683 = vmatpush1.msra.mxu0 0.0
  %684 = vmatprep.subr.mxu0 0.0
  %685 = vmatpush1.msra.mxu0 0.0
  %686 = vmatprep.subr.mxu0 0.0
  %687 = vmatpush1.msra.mxu0 0.0
  %688 = vmatprep.subr.mxu0 0.0
  %689 = vmatpush1.msra.mxu0 0.0
  %690 = vmatprep.subr.mxu0 0.0
  %691 = vmatpush1.msra.mxu0 0.0
  %692 = vmatprep.subr.mxu0 0.0
  %693 = vmatpush1.msra.mxu0 0.0
  %694 = vmatprep.subr.mxu0 0.0
  %695 = vmatpush1.msra.mxu0 0.0
  %696 = vmatprep.mubr.f32.mxu0 0.0
  %697 = vmatmul.mubr.f32.gmra.mrb[0].mxu0 %v627
  %v698 = vpop.f32.mrb[0].mxu0
  %v699 = vadd.f32 0.0, %v698
  %v700 = vpop.f32.mrb[0].mxu0
  %701 = vmatprep.mubr.f32.mxu0 0.0
  %702 = vmatmul.mubr.f32.gmra.mrb[0].mxu0 %v630
  %v703 = vpop.f32.mrb[0].mxu0
  %v704 = vadd.f32 0.0, %v703
  %v705 = vpop.f32.mrb[0].mxu0
  %706 = vdwg.mxu0
  %v707 = vrcp.pop %v699
  %v708 = vrcp.pop %v704
  %v709 = vmul.f32 %v623, %v707
  %v710 = vmul.f32 %v625, %v708
  %v712 = vsel %vm613, %v709, 0
  %v715 = vsel %vm613, %v710, 0
  %717 = vmatprep.subr.mxu0 0.0
  %718 = vmatpush1.msra.mxu0 %v500
  %719 = vmatprep.subr.mxu0 0.0
  %720 = vmatpush1.msra.mxu0 %v501
  %721 = vmatprep.subr.mxu0 0.0
  %722 = vmatpush1.msra.mxu0 %v502
  %723 = vmatprep.subr.mxu0 0.0
  %724 = vmatpush1.msra.mxu0 %v503
  %725 = vmatprep.subr.mxu0 0.0
  %726 = vmatpush1.msra.mxu0 %v504
  %727 = vmatprep.subr.mxu0 0.0
  %728 = vmatpush1.msra.mxu0 %v505
  %729 = vmatprep.subr.mxu0 0.0
  %730 = vmatpush1.msra.mxu0 %v506
  %731 = vmatprep.subr.mxu0 0.0
  %732 = vmatpush1.msra.mxu0 %v507
  %733 = vmatprep.subr.mxu0 0.0
  %734 = vmatpush1.msra.mxu0 0.0
  %735 = vmatprep.subr.mxu0 0.0
  %736 = vmatpush1.msra.mxu0 0.0
  %737 = vmatprep.subr.mxu0 0.0
  %738 = vmatpush1.msra.mxu0 0.0
  %739 = vmatprep.subr.mxu0 0.0
  %740 = vmatpush1.msra.mxu0 0.0
  %741 = vmatprep.subr.mxu0 0.0
  %742 = vmatpush1.msra.mxu0 0.0
  %743 = vmatprep.subr.mxu0 0.0
  %744 = vmatpush1.msra.mxu0 0.0
  %745 = vmatprep.subr.mxu0 0.0
  %746 = vmatpush1.msra.mxu0 0.0
  %747 = vmatprep.subr.mxu0 0.0
  %748 = vmatpush1.msra.mxu0 0.0
  %749 = vmatprep.subr.mxu0 0.0
  %750 = vmatpush1.msra.mxu0 0.0
  %751 = vmatprep.subr.mxu0 0.0
  %752 = vmatpush1.msra.mxu0 0.0
  %753 = vmatprep.subr.mxu0 0.0
  %754 = vmatpush1.msra.mxu0 0.0
  %755 = vmatprep.subr.mxu0 0.0
  %756 = vmatpush1.msra.mxu0 0.0
  %757 = vmatprep.subr.mxu0 0.0
  %758 = vmatpush1.msra.mxu0 0.0
  %759 = vmatprep.subr.mxu0 0.0
  %760 = vmatpush1.msra.mxu0 0.0
  %761 = vmatprep.subr.mxu0 0.0
  %762 = vmatpush1.msra.mxu0 0.0
  %763 = vmatprep.subr.mxu0 0.0
  %764 = vmatpush1.msra.mxu0 0.0
  %765 = vmatprep.subr.mxu0 0.0
  %766 = vmatpush1.msra.mxu0 0.0
  %767 = vmatprep.subr.mxu0 0.0
  %768 = vmatpush1.msra.mxu0 0.0
  %769 = vmatprep.subr.mxu0 0.0
  %770 = vmatpush1.msra.mxu0 0.0
  %771 = vmatprep.subr.mxu0 0.0
  %772 = vmatpush1.msra.mxu0 0.0
  %773 = vmatprep.subr.mxu0 0.0
  %774 = vmatpush1.msra.mxu0 0.0
  %775 = vmatprep.subr.mxu0 0.0
  %776 = vmatpush1.msra.mxu0 0.0
  %777 = vmatprep.subr.mxu0 0.0
  %778 = vmatpush1.msra.mxu0 0.0
  %779 = vmatprep.subr.mxu0 0.0
  %780 = vmatpush1.msra.mxu0 0.0
  %781 = vmatprep.mubr.f32.mxu0 0.0
  %782 = vmatmul.mubr.f32.gmra.mrb[0].mxu0 %v712
  %v783 = vpop.f32.mrb[0].mxu0
  %v784 = vadd.f32 0.0, %v783
  %v785 = vpop.f32.mrb[0].mxu0
  %786 = vmatprep.mubr.f32.mxu0 0.0
  %787 = vmatmul.mubr.f32.gmra.mrb[0].mxu0 %v715
  %v788 = vpop.f32.mrb[0].mxu0
  %v789 = vadd.f32 0.0, %v788
  %v790 = vpop.f32.mrb[0].mxu0
  %791 = vdwg.mxu0
  %v792 = vld [vmem:[%s11] sm:$0xff]
  %v793 = vld [vmem:[%s11 + $0x8] sm:$0xff]
  %v794 = vld [vmem:[%s11 + $0x10] sm:$0xff]
  %v795 = vld [vmem:[%s11 + $0x18] sm:$0xff]
  %v796 = vld [vmem:[%s12] sm:$0x1]
  %v798 = vlaneseq
  %v799 = vshrl.u32 %v798, 7
  %v800 = vsub.s32 0, %v799
  %v801 = vrot.slane %v796, %v800
  %v804 = vsel %vm105, %v784, 0
  %v807 = vsel %vm105, %v789, 0
  %809 = vmatprep.subr.mxu0 0.0
  %810 = vmatpush1.msra.mxu0 %v792
  %811 = vmatprep.subr.mxu0 0.0
  %812 = vmatpush1.msra.mxu0 %v793
  %813 = vmatprep.subr.mxu0 0.0
  %814 = vmatpush1.msra.mxu0 %v794
  %815 = vmatprep.subr.mxu0 0.0
  %816 = vmatpush1.msra.mxu0 %v795
  %817 = vmatprep.subr.mxu0 0.0
  %818 = vmatpush1.msra.mxu0 0.0
  %819 = vmatprep.subr.mxu0 0.0
  %820 = vmatpush1.msra.mxu0 0.0
  %821 = vmatprep.subr.mxu0 0.0
  %822 = vmatpush1.msra.mxu0 0.0
  %823 = vmatprep.subr.mxu0 0.0
  %824 = vmatpush1.msra.mxu0 0.0
  %825 = vmatprep.subr.mxu0 0.0
  %826 = vmatpush1.msra.mxu0 0.0
  %827 = vmatprep.subr.mxu0 0.0
  %828 = vmatpush1.msra.mxu0 0.0
  %829 = vmatprep.subr.mxu0 0.0
  %830 = vmatpush1.msra.mxu0 0.0
  %831 = vmatprep.subr.mxu0 0.0
  %832 = vmatpush1.msra.mxu0 0.0
  %833 = vmatprep.subr.mxu0 0.0
  %834 = vmatpush1.msra.mxu0 0.0
  %835 = vmatprep.subr.mxu0 0.0
  %836 = vmatpush1.msra.mxu0 0.0
  %837 = vmatprep.subr.mxu0 0.0
  %838 = vmatpush1.msra.mxu0 0.0
  %839 = vmatprep.subr.mxu0 0.0
  %840 = vmatpush1.msra.mxu0 0.0
  %841 = vmatprep.subr.mxu0 0.0
  %842 = vmatpush1.msra.mxu0 0.0
  %843 = vmatprep.subr.mxu0 0.0
  %844 = vmatpush1.msra.mxu0 0.0
  %845 = vmatprep.subr.mxu0 0.0
  %846 = vmatpush1.msra.mxu0 0.0
  %847 = vmatprep.subr.mxu0 0.0
  %848 = vmatpush1.msra.mxu0 0.0
  %849 = vmatprep.subr.mxu0 0.0
  %850 = vmatpush1.msra.mxu0 0.0
  %851 = vmatprep.subr.mxu0 0.0
  %852 = vmatpush1.msra.mxu0 0.0
  %853 = vmatprep.subr.mxu0 0.0
  %854 = vmatpush1.msra.mxu0 0.0
  %855 = vmatprep.subr.mxu0 0.0
  %856 = vmatpush1.msra.mxu0 0.0
  %857 = vmatprep.subr.mxu0 0.0
  %858 = vmatpush1.msra.mxu0 0.0
  %859 = vmatprep.subr.mxu0 0.0
  %860 = vmatpush1.msra.mxu0 0.0
  %861 = vmatprep.subr.mxu0 0.0
  %862 = vmatpush1.msra.mxu0 0.0
  %863 = vmatprep.subr.mxu0 0.0
  %864 = vmatpush1.msra.mxu0 0.0
  %865 = vmatprep.subr.mxu0 0.0
  %866 = vmatpush1.msra.mxu0 0.0
  %867 = vmatprep.subr.mxu0 0.0
  %868 = vmatpush1.msra.mxu0 0.0
  %869 = vmatprep.subr.mxu0 0.0
  %870 = vmatpush1.msra.mxu0 0.0
  %871 = vmatprep.subr.mxu0 0.0
  %872 = vmatpush1.msra.mxu0 0.0
  %873 = vmatprep.mubr.f32.mxu0 0.0
  %874 = vmatmul.mubr.f32.gmra.mrb[0].mxu0 %v804
  %v875 = vpop.f32.mrb[0].mxu0
  %v876 = vadd.f32 %v801, %v875
  %v877 = vpop.f32.mrb[0].mxu0
  %878 = vmatprep.mubr.f32.mxu0 0.0
  %879 = vmatmul.mubr.f32.gmra.mrb[0].mxu0 %v807
  %v880 = vpop.f32.mrb[0].mxu0
  %v881 = vadd.f32 %v801, %v880
  %v882 = vpop.f32.mrb[0].mxu0
  %883 = vdwg.mxu0
  %v884 = vadd.f32 %v75, %v876
  %v885 = vadd.f32 %v76, %v881
  %v886 = vld [vmem:[%s13] sm:$0x1]
  %v887 = vld [vmem:[%s14] sm:$0x1]
  %v888 = vsel %vm105, %v884, 0.0
  %889 = vadd.xlane.f32.xlu0 %v888
  %v890 = vpop.xlane.xlu0 %889
  %v891 = vsel %vm105, %v885, 0.0
  %892 = vadd.xlane.f32.xlu0 %v891
  %v893 = vpop.xlane.xlu0 %892
  %v894 = vmul.f32 %v890, %v112
  %v895 = vmul.f32 %v893, %v112
  %v896 = vsub.f32 %v884, %v894
  %v897 = vsub.f32 %v885, %v895
  %v898 = vmul.f32 %v896, %v896
  %v899 = vmul.f32 %v897, %v897
  %v900 = vsel %vm105, %v898, 0.0
  %901 = vadd.xlane.f32.xlu0 %v900
  %v902 = vpop.xlane.xlu0 %901
  %v903 = vsel %vm105, %v899, 0.0
  %904 = vadd.xlane.f32.xlu0 %v903
  %v905 = vpop.xlane.xlu0 %904
  %v906 = vmul.f32 %v902, %v112
  %v907 = vmul.f32 %v905, %v112
  %v908 = vadd.f32 %v906, 1e-05
  %v909 = vadd.f32 %v907, 1e-05
  %v910 = vrsqrt.pop %v908
  %v911 = vrsqrt.pop %v909
  %v912 = vmul.f32 %v896, %v910
  %v913 = vmul.f32 %v897, %v911
  %v915 = vlaneseq
  %v916 = vshrl.u32 %v915, 7
  %v917 = vsub.s32 0, %v916
  %v918 = vrot.slane %v886, %v917
  %v920 = vmul.f32 %v912, %v918
  %v921 = vmul.f32 %v913, %v918
  %v923 = vlaneseq
  %v924 = vshrl.u32 %v923, 7
  %v925 = vsub.s32 0, %v924
  %v926 = vrot.slane %v887, %v925
  %v928 = vadd.f32 %v920, %v926
  %v929 = vadd.f32 %v921, %v926
  %v930 = vld [vmem:[%s15] sm:$0xff]
  %v931 = vld [vmem:[%s15 + $0x8] sm:$0xff]
  %v932 = vld [vmem:[%s15 + $0x10] sm:$0xff]
  %v933 = vld [vmem:[%s15 + $0x18] sm:$0xff]
  %v934 = vld [vmem:[%s16] sm:$0x1]
  %v936 = vlaneseq
  %v937 = vshrl.u32 %v936, 7
  %v938 = vsub.s32 0, %v937
  %v939 = vrot.slane %v934, %v938
  %v942 = vsel %vm105, %v928, 0
  %v945 = vsel %vm105, %v929, 0
  %947 = vmatprep.subr.mxu0 0.0
  %948 = vmatpush1.msra.mxu0 %v930
  %949 = vmatprep.subr.mxu0 0.0
  %950 = vmatpush1.msra.mxu0 %v931
  %951 = vmatprep.subr.mxu0 0.0
  %952 = vmatpush1.msra.mxu0 %v932
  %953 = vmatprep.subr.mxu0 0.0
  %954 = vmatpush1.msra.mxu0 %v933
  %955 = vmatprep.subr.mxu0 0.0
  %956 = vmatpush1.msra.mxu0 0.0
  %957 = vmatprep.subr.mxu0 0.0
  %958 = vmatpush1.msra.mxu0 0.0
  %959 = vmatprep.subr.mxu0 0.0
  %960 = vmatpush1.msra.mxu0 0.0
  %961 = vmatprep.subr.mxu0 0.0
  %962 = vmatpush1.msra.mxu0 0.0
  %963 = vmatprep.subr.mxu0 0.0
  %964 = vmatpush1.msra.mxu0 0.0
  %965 = vmatprep.subr.mxu0 0.0
  %966 = vmatpush1.msra.mxu0 0.0
  %967 = vmatprep.subr.mxu0 0.0
  %968 = vmatpush1.msra.mxu0 0.0
  %969 = vmatprep.subr.mxu0 0.0
  %970 = vmatpush1.msra.mxu0 0.0
  %971 = vmatprep.subr.mxu0 0.0
  %972 = vmatpush1.msra.mxu0 0.0
  %973 = vmatprep.subr.mxu0 0.0
  %974 = vmatpush1.msra.mxu0 0.0
  %975 = vmatprep.subr.mxu0 0.0
  %976 = vmatpush1.msra.mxu0 0.0
  %977 = vmatprep.subr.mxu0 0.0
  %978 = vmatpush1.msra.mxu0 0.0
  %979 = vmatprep.subr.mxu0 0.0
  %980 = vmatpush1.msra.mxu0 0.0
  %981 = vmatprep.subr.mxu0 0.0
  %982 = vmatpush1.msra.mxu0 0.0
  %983 = vmatprep.subr.mxu0 0.0
  %984 = vmatpush1.msra.mxu0 0.0
  %985 = vmatprep.subr.mxu0 0.0
  %986 = vmatpush1.msra.mxu0 0.0
  %987 = vmatprep.subr.mxu0 0.0
  %988 = vmatpush1.msra.mxu0 0.0
  %989 = vmatprep.subr.mxu0 0.0
  %990 = vmatpush1.msra.mxu0 0.0
  %991 = vmatprep.subr.mxu0 0.0
  %992 = vmatpush1.msra.mxu0 0.0
  %993 = vmatprep.subr.mxu0 0.0
  %994 = vmatpush1.msra.mxu0 0.0
  %995 = vmatprep.subr.mxu0 0.0
  %996 = vmatpush1.msra.mxu0 0.0
  %997 = vmatprep.subr.mxu0 0.0
  %998 = vmatpush1.msra.mxu0 0.0
  %999 = vmatprep.subr.mxu0 0.0
  %1000 = vmatpush1.msra.mxu0 0.0
  %1001 = vmatprep.subr.mxu0 0.0
  %1002 = vmatpush1.msra.mxu0 0.0
  %1003 = vmatprep.subr.mxu0 0.0
  %1004 = vmatpush1.msra.mxu0 0.0
  %1005 = vmatprep.subr.mxu0 0.0
  %1006 = vmatpush1.msra.mxu0 0.0
  %1007 = vmatprep.subr.mxu0 0.0
  %1008 = vmatpush1.msra.mxu0 0.0
  %1009 = vmatprep.subr.mxu0 0.0
  %1010 = vmatpush1.msra.mxu0 0.0
  %1011 = vmatprep.mubr.f32.mxu0 0.0
  %1012 = vmatmul.mubr.f32.gmra.mrb[0].mxu0 %v942
  %v1013 = vpop.f32.mrb[0].mxu0
  %v1014 = vadd.f32 %v939, %v1013
  %v1015 = vpop.f32.mrb[0].mxu0
  %1016 = vmatprep.mubr.f32.mxu0 0.0
  %1017 = vmatmul.mubr.f32.gmra.mrb[0].mxu0 %v945
  %v1018 = vpop.f32.mrb[0].mxu0
  %v1019 = vadd.f32 %v939, %v1018
  %v1020 = vpop.f32.mrb[0].mxu0
  %1021 = vdwg.mxu0
  %v1022 = vmul.f32 %v1014, 1.702
  %v1023 = vmul.f32 %v1019, 1.702
  %v1024 = vxor.u32 %v1022, 2147483648
  %v1025 = vxor.u32 %v1023, 2147483648
  %v1026 = vmul.f32 %v1024, 1.442695
  %v1027 = vpow.pop %v1026
  %v1028 = vmul.f32 %v1025, 1.442695
  %v1029 = vpow.pop %v1028
  %v1030 = vadd.f32 %v1027, 1.0
  %v1031 = vadd.f32 %v1029, 1.0
  %v1032 = vrcp.pop %v1030
  %v1033 = vmul.f32 1.0, %v1032
  %v1034 = vrcp.pop %v1031
  %v1035 = vmul.f32 1.0, %v1034
  %v1036 = vmul.f32 %v1014, %v1033
  %v1037 = vmul.f32 %v1019, %v1035
  %v1038 = vld [vmem:[%s17] sm:$0xff]
  %v1039 = vld [vmem:[%s17 + $0x8] sm:$0xff]
  %v1040 = vld [vmem:[%s17 + $0x10] sm:$0xff]
  %v1041 = vld [vmem:[%s17 + $0x18] sm:$0xff]
  %v1042 = vld [vmem:[%s17 + $0x20] sm:$0xff]
  %v1043 = vld [vmem:[%s17 + $0x28] sm:$0xff]
  %v1044 = vld [vmem:[%s17 + $0x30] sm:$0xff]
  %v1045 = vld [vmem:[%s17 + $0x38] sm:$0xff]
  %v1046 = vld [vmem:[%s17 + $0x40] sm:$0xff]
  %v1047 = vld [vmem:[%s17 + $0x48] sm:$0xff]
  %v1048 = vld [vmem:[%s17 + $0x50] sm:$0xff]
  %v1049 = vld [vmem:[%s17 + $0x58] sm:$0xff]
  %v1050 = vld [vmem:[%s17 + $0x60] sm:$0xff]
  %v1051 = vld [vmem:[%s17 + $0x68] sm:$0xff]
  %v1052 = vld [vmem:[%s17 + $0x70] sm:$0xff]
  %v1053 = vld [vmem:[%s17 + $0x78] sm:$0xff]
  %v1054 = vld [vmem:[%s18] sm:$0x1]
  %v1056 = vlaneseq
  %v1057 = vshrl.u32 %v1056, 7
  %v1058 = vsub.s32 0, %v1057
  %v1059 = vrot.slane %v1054, %v1058
  %1061 = vmatprep.subr.mxu0 0.0
  %1062 = vmatpush1.msra.mxu0 %v1038
  %1063 = vmatprep.subr.mxu0 0.0
  %1064 = vmatpush1.msra.mxu0 %v1039
  %1065 = vmatprep.subr.mxu0 0.0
  %1066 = vmatpush1.msra.mxu0 %v1040
  %1067 = vmatprep.subr.mxu0 0.0
  %1068 = vmatpush1.msra.mxu0 %v1041
  %1069 = vmatprep.subr.mxu0 0.0
  %1070 = vmatpush1.msra.mxu0 %v1042
  %1071 = vmatprep.subr.mxu0 0.0
  %1072 = vmatpush1.msra.mxu0 %v1043
  %1073 = vmatprep.subr.mxu0 0.0
  %1074 = vmatpush1.msra.mxu0 %v1044
  %1075 = vmatprep.subr.mxu0 0.0
  %1076 = vmatpush1.msra.mxu0 %v1045
  %1077 = vmatprep.subr.mxu0 0.0
  %1078 = vmatpush1.msra.mxu0 %v1046
  %1079 = vmatprep.subr.mxu0 0.0
  %1080 = vmatpush1.msra.mxu0 %v1047
  %1081 = vmatprep.subr.mxu0 0.0
  %1082 = vmatpush1.msra.mxu0 %v1048
  %1083 = vmatprep.subr.mxu0 0.0
  %1084 = vmatpush1.msra.mxu0 %v1049
  %1085 = vmatprep.subr.mxu0 0.0
  %1086 = vmatpush1.msra.mxu0 %v1050
  %1087 = vmatprep.subr.mxu0 0.0
  %1088 = vmatpush1.msra.mxu0 %v1051
  %1089 = vmatprep.subr.mxu0 0.0
  %1090 = vmatpush1.msra.mxu0 %v1052
  %1091 = vmatprep.subr.mxu0 0.0
  %1092 = vmatpush1.msra.mxu0 %v1053
  %1093 = vmatprep.subr.mxu0 0.0
  %1094 = vmatpush1.msra.mxu0 0.0
  %1095 = vmatprep.subr.mxu0 0.0
  %1096 = vmatpush1.msra.mxu0 0.0
  %1097 = vmatprep.subr.mxu0 0.0
  %1098 = vmatpush1.msra.mxu0 0.0
  %1099 = vmatprep.subr.mxu0 0.0
  %1100 = vmatpush1.msra.mxu0 0.0
  %1101 = vmatprep.subr.mxu0 0.0
  %1102 = vmatpush1.msra.mxu0 0.0
  %1103 = vmatprep.subr.mxu0 0.0
  %1104 = vmatpush1.msra.mxu0 0.0
  %1105 = vmatprep.subr.mxu0 0.0
  %1106 = vmatpush1.msra.mxu0 0.0
  %1107 = vmatprep.subr.mxu0 0.0
  %1108 = vmatpush1.msra.mxu0 0.0
  %1109 = vmatprep.subr.mxu0 0.0
  %1110 = vmatpush1.msra.mxu0 0.0
  %1111 = vmatprep.subr.mxu0 0.0
  %1112 = vmatpush1.msra.mxu0 0.0
  %1113 = vmatprep.subr.mxu0 0.0
  %1114 = vmatpush1.msra.mxu0 0.0
  %1115 = vmatprep.subr.mxu0 0.0
  %1116 = vmatpush1.msra.mxu0 0.0
  %1117 = vmatprep.subr.mxu0 0.0
  %1118 = vmatpush1.msra.mxu0 0.0
  %1119 = vmatprep.subr.mxu0 0.0
  %1120 = vmatpush1.msra.mxu0 0.0
  %1121 = vmatprep.subr.mxu0 0.0
  %1122 = vmatpush1.msra.mxu0 0.0
  %1123 = vmatprep.subr.mxu0 0.0
  %1124 = vmatpush1.msra.mxu0 0.0
  %1125 = vmatprep.mubr.f32.mxu0 0.0
  %1126 = vmatmul.mubr.f32.gmra.mrb[0].mxu0 %v1036
  %v1127 = vpop.f32.mrb[0].mxu0
  %v1128 = vadd.f32 %v1059, %v1127
  %v1129 = vpop.f32.mrb[0].mxu0
  %1130 = vmatprep.mubr.f32.mxu0 0.0
  %1131 = vmatmul.mubr.f32.gmra.mrb[0].mxu0 %v1037
  %v1132 = vpop.f32.mrb[0].mxu0
  %v1133 = vadd.f32 %v1059, %v1132
  %v1134 = vpop.f32.mrb[0].mxu0
  %1135 = vdwg.mxu0
  %v1136 = vadd.f32 %v884, %v1128
  %v1137 = vadd.f32 %v885, %v1133
  %s1138 = scalar_lea.vmem %s7, 1
  %v1139 = vld [vmem:[%s1138] sm:$0x1]
  %s1140 = scalar_lea.vmem %s8, 1
  %v1141 = vld [vmem:[%s1140] sm:$0x1]
  %v1142 = vsel %vm105, %v1136, 0.0
  %1143 = vadd.xlane.f32.xlu0 %v1142
  %v1144 = vpop.xlane.xlu0 %1143
  %v1145 = vsel %vm105, %v1137, 0.0
  %1146 = vadd.xlane.f32.xlu0 %v1145
  %v1147 = vpop.xlane.xlu0 %1146
  %v1148 = vmul.f32 %v1144, %v112
  %v1149 = vmul.f32 %v1147, %v112
  %v1150 = vsub.f32 %v1136, %v1148
  %v1151 = vsub.f32 %v1137, %v1149
  %v1152 = vmul.f32 %v1150, %v1150
  %v1153 = vmul.f32 %v1151, %v1151
  %v1154 = vsel %vm105, %v1152, 0.0
  %1155 = vadd.xlane.f32.xlu0 %v1154
  %v1156 = vpop.xlane.xlu0 %1155
  %v1157 = vsel %vm105, %v1153, 0.0
  %1158 = vadd.xlane.f32.xlu0 %v1157
  %v1159 = vpop.xlane.xlu0 %1158
  %v1160 = vmul.f32 %v1156, %v112
  %v1161 = vmul.f32 %v1159, %v112
  %v1162 = vadd.f32 %v1160, 1e-05
  %v1163 = vadd.f32 %v1161, 1e-05
  %v1164 = vrsqrt.pop %v1162
  %v1165 = vrsqrt.pop %v1163
  %v1166 = vmul.f32 %v1150, %v1164
  %v1167 = vmul.f32 %v1151, %v1165
  %v1169 = vlaneseq
  %v1170 = vshrl.u32 %v1169, 7
  %v1171 = vsub.s32 0, %v1170
  %v1172 = vrot.slane %v1139, %v1171
  %v1174 = vmul.f32 %v1166, %v1172
  %v1175 = vmul.f32 %v1167, %v1172
  %v1177 = vlaneseq
  %v1178 = vshrl.u32 %v1177, 7
  %v1179 = vsub.s32 0, %v1178
  %v1180 = vrot.slane %v1141, %v1179
  %v1182 = vadd.f32 %v1174, %v1180
  %v1183 = vadd.f32 %v1175, %v1180
  %s1184 = scalar_lea.vmem %s9, 32
  %v1185 = vld [vmem:[%s1184] sm:$0xff]
  %v1186 = vld [vmem:[%s1184 + $0x8] sm:$0xff]
  %v1187 = vld [vmem:[%s1184 + $0x10] sm:$0xff]
  %v1188 = vld [vmem:[%s1184 + $0x18] sm:$0xff]
  %s1189 = scalar_lea.vmem %s10, 1
  %v1190 = vld [vmem:[%s1189] sm:$0x1]
  %v1192 = vlaneseq
  %v1193 = vshrl.u32 %v1192, 7
  %v1194 = vsub.s32 0, %v1193
  %v1195 = vrot.slane %v1190, %v1194
  %v1198 = vsel %vm105, %v1182, 0
  %v1201 = vsel %vm105, %v1183, 0
  %1203 = vmatprep.subr.mxu0 0.0
  %1204 = vmatpush1.msra.mxu0 %v1185
  %1205 = vmatprep.subr.mxu0 0.0
  %1206 = vmatpush1.msra.mxu0 %v1186
  %1207 = vmatprep.subr.mxu0 0.0
  %1208 = vmatpush1.msra.mxu0 %v1187
  %1209 = vmatprep.subr.mxu0 0.0
  %1210 = vmatpush1.msra.mxu0 %v1188
  %1211 = vmatprep.subr.mxu0 0.0
  %1212 = vmatpush1.msra.mxu0 0.0
  %1213 = vmatprep.subr.mxu0 0.0
  %1214 = vmatpush1.msra.mxu0 0.0
  %1215 = vmatprep.subr.mxu0 0.0
  %1216 = vmatpush1.msra.mxu0 0.0
  %1217 = vmatprep.subr.mxu0 0.0
  %1218 = vmatpush1.msra.mxu0 0.0
  %1219 = vmatprep.subr.mxu0 0.0
  %1220 = vmatpush1.msra.mxu0 0.0
  %1221 = vmatprep.subr.mxu0 0.0
  %1222 = vmatpush1.msra.mxu0 0.0
  %1223 = vmatprep.subr.mxu0 0.0
  %1224 = vmatpush1.msra.mxu0 0.0
  %1225 = vmatprep.subr.mxu0 0.0
  %1226 = vmatpush1.msra.mxu0 0.0
  %1227 = vmatprep.subr.mxu0 0.0
  %1228 = vmatpush1.msra.mxu0 0.0
  %1229 = vmatprep.subr.mxu0 0.0
  %1230 = vmatpush1.msra.mxu0 0.0
  %1231 = vmatprep.subr.mxu0 0.0
  %1232 = vmatpush1.msra.mxu0 0.0
  %1233 = vmatprep.subr.mxu0 0.0
  %1234 = vmatpush1.msra.mxu0 0.0
  %1235 = vmatprep.subr.mxu0 0.0
  %1236 = vmatpush1.msra.mxu0 0.0
  %1237 = vmatprep.subr.mxu0 0.0
  %1238 = vmatpush1.msra.mxu0 0.0
  %1239 = vmatprep.subr.mxu0 0.0
  %1240 = vmatpush1.msra.mxu0 0.0
  %1241 = vmatprep.subr.mxu0 0.0
  %1242 = vmatpush1.msra.mxu0 0.0
  %1243 = vmatprep.subr.mxu0 0.0
  %1244 = vmatpush1.msra.mxu0 0.0
  %1245 = vmatprep.subr.mxu0 0.0
  %1246 = vmatpush1.msra.mxu0 0.0
  %1247 = vmatprep.subr.mxu0 0.0
  %1248 = vmatpush1.msra.mxu0 0.0
  %1249 = vmatprep.subr.mxu0 0.0
  %1250 = vmatpush1.msra.mxu0 0.0
  %1251 = vmatprep.subr.mxu0 0.0
  %1252 = vmatpush1.msra.mxu0 0.0
  %1253 = vmatprep.subr.mxu0 0.0
  %1254 = vmatpush1.msra.mxu0 0.0
  %1255 = vmatprep.subr.mxu0 0.0
  %1256 = vmatpush1.msra.mxu0 0.0
  %1257 = vmatprep.subr.mxu0 0.0
  %1258 = vmatpush1.msra.mxu0 0.0
  %1259 = vmatprep.subr.mxu0 0.0
  %1260 = vmatpush1.msra.mxu0 0.0
  %1261 = vmatprep.subr.mxu0 0.0
  %1262 = vmatpush1.msra.mxu0 0.0
  %1263 = vmatprep.subr.mxu0 0.0
  %1264 = vmatpush1.msra.mxu0 0.0
  %1265 = vmatprep.subr.mxu0 0.0
  %1266 = vmatpush1.msra.mxu0 0.0
  %1267 = vmatprep.mubr.f32.mxu0 0.0
  %1268 = vmatmul.mubr.f32.gmra.mrb[0].mxu0 %v1198
  %v1269 = vpop.f32.mrb[0].mxu0
  %v1270 = vadd.f32 %v1195, %v1269
  %v1271 = vpop.f32.mrb[0].mxu0
  %1272 = vmatprep.mubr.f32.mxu0 0.0
  %1273 = vmatmul.mubr.f32.gmra.mrb[0].mxu0 %v1201
  %v1274 = vpop.f32.mrb[0].mxu0
  %v1275 = vadd.f32 %v1195, %v1274
  %v1276 = vpop.f32.mrb[0].mxu0
  %1277 = vdwg.mxu0
  %v1278 = vmul.f32 %v1270, 0.35355338
  %v1279 = vmul.f32 %v1275, 0.35355338
  %1282 = vrot.lane.b32.xlu0 %v1270, 96
  %v1283 = vpop.permute.xlu0 %1282
  %1284 = vrot.lane.b32.xlu0 %v1275, 96
  %v1285 = vpop.permute.xlu0 %1284
  %1288 = vmatprep.subr.mxu0 0.0
  %1289 = vmatpush1.msra.mxu0 %v1283
  %1290 = vmatprep.subr.mxu0 0.0
  %1291 = vmatpush1.msra.mxu0 %v1285
  %1292 = vmatprep.subr.mxu0 0.0
  %1293 = vmatpush1.msra.mxu0 0.0
  %1294 = vmatprep.subr.mxu0 0.0
  %1295 = vmatpush1.msra.mxu0 0.0
  %1296 = vmatprep.subr.mxu0 0.0
  %1297 = vmatpush1.msra.mxu0 0.0
  %1298 = vmatprep.subr.mxu0 0.0
  %1299 = vmatpush1.msra.mxu0 0.0
  %1300 = vmatprep.subr.mxu0 0.0
  %1301 = vmatpush1.msra.mxu0 0.0
  %1302 = vmatprep.subr.mxu0 0.0
  %1303 = vmatpush1.msra.mxu0 0.0
  %1304 = vmatprep.subr.mxu0 0.0
  %1305 = vmatpush1.msra.mxu0 0.0
  %1306 = vmatprep.subr.mxu0 0.0
  %1307 = vmatpush1.msra.mxu0 0.0
  %1308 = vmatprep.subr.mxu0 0.0
  %1309 = vmatpush1.msra.mxu0 0.0
  %1310 = vmatprep.subr.mxu0 0.0
  %1311 = vmatpush1.msra.mxu0 0.0
  %1312 = vmatprep.subr.mxu0 0.0
  %1313 = vmatpush1.msra.mxu0 0.0
  %1314 = vmatprep.subr.mxu0 0.0
  %1315 = vmatpush1.msra.mxu0 0.0
  %1316 = vmatprep.subr.mxu0 0.0
  %1317 = vmatpush1.msra.mxu0 0.0
  %1318 = vmatprep.subr.mxu0 0.0
  %1319 = vmatpush1.msra.mxu0 0.0
  %1320 = vmatprep.subr.mxu0 0.0
  %1321 = vmatpush1.msra.mxu0 0.0
  %1322 = vmatprep.subr.mxu0 0.0
  %1323 = vmatpush1.msra.mxu0 0.0
  %1324 = vmatprep.subr.mxu0 0.0
  %1325 = vmatpush1.msra.mxu0 0.0
  %1326 = vmatprep.subr.mxu0 0.0
  %1327 = vmatpush1.msra.mxu0 0.0
  %1328 = vmatprep.subr.mxu0 0.0
  %1329 = vmatpush1.msra.mxu0 0.0
  %1330 = vmatprep.subr.mxu0 0.0
  %1331 = vmatpush1.msra.mxu0 0.0
  %1332 = vmatprep.subr.mxu0 0.0
  %1333 = vmatpush1.msra.mxu0 0.0
  %1334 = vmatprep.subr.mxu0 0.0
  %1335 = vmatpush1.msra.mxu0 0.0
  %1336 = vmatprep.subr.mxu0 0.0
  %1337 = vmatpush1.msra.mxu0 0.0
  %1338 = vmatprep.subr.mxu0 0.0
  %1339 = vmatpush1.msra.mxu0 0.0
  %1340 = vmatprep.subr.mxu0 0.0
  %1341 = vmatpush1.msra.mxu0 0.0
  %1342 = vmatprep.subr.mxu0 0.0
  %1343 = vmatpush1.msra.mxu0 0.0
  %1344 = vmatprep.subr.mxu0 0.0
  %1345 = vmatpush1.msra.mxu0 0.0
  %1346 = vmatprep.subr.mxu0 0.0
  %1347 = vmatpush1.msra.mxu0 0.0
  %1348 = vmatprep.subr.mxu0 0.0
  %1349 = vmatpush1.msra.mxu0 0.0
  %1350 = vmatprep.subr.mxu0 0.0
  %1351 = vmatpush1.msra.mxu0 0.0
  %1352 = vmatprep.mubr.f32.mxu0 0.0
  %1353 = vmatmul.mubr.f32.gmra.mrb[0].mxu0 %v253
  %v1354 = vpop.f32.mrb[0].mxu0
  %v1355 = vadd.f32 0.0, %v1354
  %v1356 = vpop.f32.mrb[0].mxu0
  %1357 = vmatprep.mubr.f32.mxu0 0.0
  %1358 = vmatmul.mubr.f32.gmra.mrb[0].mxu0 %v256
  %v1359 = vpop.f32.mrb[0].mxu0
  %v1360 = vadd.f32 0.0, %v1359
  %v1361 = vpop.f32.mrb[0].mxu0
  %1362 = vmatprep.mubr.f32.mxu0 0.0
  %1363 = vmatmul.mubr.f32.gmra.mrb[0].mxu0 %v259
  %v1364 = vpop.f32.mrb[0].mxu0
  %v1365 = vadd.f32 0.0, %v1364
  %v1366 = vpop.f32.mrb[0].mxu0
  %1367 = vmatprep.mubr.f32.mxu0 0.0
  %1368 = vmatmul.mubr.f32.gmra.mrb[0].mxu0 %v262
  %v1369 = vpop.f32.mrb[0].mxu0
  %v1370 = vadd.f32 0.0, %v1369
  %v1371 = vpop.f32.mrb[0].mxu0
  %1372 = vmatprep.mubr.f32.mxu0 0.0
  %1373 = vmatmul.mubr.f32.gmra.mrb[0].mxu0 %v265
  %v1374 = vpop.f32.mrb[0].mxu0
  %v1375 = vadd.f32 0.0, %v1374
  %v1376 = vpop.f32.mrb[0].mxu0
  %1377 = vmatprep.mubr.f32.mxu0 0.0
  %1378 = vmatmul.mubr.f32.gmra.mrb[0].mxu0 %v268
  %v1379 = vpop.f32.mrb[0].mxu0
  %v1380 = vadd.f32 0.0, %v1379
  %v1381 = vpop.f32.mrb[0].mxu0
  %1382 = vmatprep.mubr.f32.mxu0 0.0
  %1383 = vmatmul.mubr.f32.gmra.mrb[0].mxu0 %v271
  %v1384 = vpop.f32.mrb[0].mxu0
  %v1385 = vadd.f32 0.0, %v1384
  %v1386 = vpop.f32.mrb[0].mxu0
  %1387 = vmatprep.mubr.f32.mxu0 0.0
  %1388 = vmatmul.mubr.f32.gmra.mrb[0].mxu0 %v274
  %v1389 = vpop.f32.mrb[0].mxu0
  %v1390 = vadd.f32 0.0, %v1389
  %v1391 = vpop.f32.mrb[0].mxu0
  %1392 = vdwg.mxu0
  %v1393 = vmul.f32 %v1355, %v87
  %v1394 = vmul.f32 %v1360, %v88
  %v1395 = vmul.f32 %v1365, %v89
  %v1396 = vmul.f32 %v1370, %v90
  %v1397 = vmul.f32 %v1375, %v91
  %v1398 = vmul.f32 %v1380, %v92
  %v1399 = vmul.f32 %v1385, %v93
  %v1400 = vmul.f32 %v1390, %v94
  %1401 = vrot.lane.b32.xlu0 %v1270, 64
  %v1402 = vpop.permute.xlu0 %1401
  %1403 = vrot.lane.b32.xlu0 %v1275, 64
  %v1404 = vpop.permute.xlu0 %1403
  %1407 = vmatprep.subr.mxu0 0.0
  %1408 = vmatpush1.msra.mxu0 %v1402
  %1409 = vmatprep.subr.mxu0 0.0
  %1410 = vmatpush1.msra.mxu0 %v1404
  %1411 = vmatprep.subr.mxu0 0.0
  %1412 = vmatpush1.msra.mxu0 0.0
  %1413 = vmatprep.subr.mxu0 0.0
  %1414 = vmatpush1.msra.mxu0 0.0
  %1415 = vmatprep.subr.mxu0 0.0
  %1416 = vmatpush1.msra.mxu0 0.0
  %1417 = vmatprep.subr.mxu0 0.0
  %1418 = vmatpush1.msra.mxu0 0.0
  %1419 = vmatprep.subr.mxu0 0.0
  %1420 = vmatpush1.msra.mxu0 0.0
  %1421 = vmatprep.subr.mxu0 0.0
  %1422 = vmatpush1.msra.mxu0 0.0
  %1423 = vmatprep.subr.mxu0 0.0
  %1424 = vmatpush1.msra.mxu0 0.0
  %1425 = vmatprep.subr.mxu0 0.0
  %1426 = vmatpush1.msra.mxu0 0.0
  %1427 = vmatprep.subr.mxu0 0.0
  %1428 = vmatpush1.msra.mxu0 0.0
  %1429 = vmatprep.subr.mxu0 0.0
  %1430 = vmatpush1.msra.mxu0 0.0
  %1431 = vmatprep.subr.mxu0 0.0
  %1432 = vmatpush1.msra.mxu0 0.0
  %1433 = vmatprep.subr.mxu0 0.0
  %1434 = vmatpush1.msra.mxu0 0.0
  %1435 = vmatprep.subr.mxu0 0.0
  %1436 = vmatpush1.msra.mxu0 0.0
  %1437 = vmatprep.subr.mxu0 0.0
  %1438 = vmatpush1.msra.mxu0 0.0
  %1439 = vmatprep.subr.mxu0 0.0
  %1440 = vmatpush1.msra.mxu0 0.0
  %1441 = vmatprep.subr.mxu0 0.0
  %1442 = vmatpush1.msra.mxu0 0.0
  %1443 = vmatprep.subr.mxu0 0.0
  %1444 = vmatpush1.msra.mxu0 0.0
  %1445 = vmatprep.subr.mxu0 0.0
  %1446 = vmatpush1.msra.mxu0 0.0
  %1447 = vmatprep.subr.mxu0 0.0
  %1448 = vmatpush1.msra.mxu0 0.0
  %1449 = vmatprep.subr.mxu0 0.0
  %1450 = vmatpush1.msra.mxu0 0.0
  %1451 = vmatprep.subr.mxu0 0.0
  %1452 = vmatpush1.msra.mxu0 0.0
  %1453 = vmatprep.subr.mxu0 0.0
  %1454 = vmatpush1.msra.mxu0 0.0
  %1455 = vmatprep.subr.mxu0 0.0
  %1456 = vmatpush1.msra.mxu0 0.0
  %1457 = vmatprep.subr.mxu0 0.0
  %1458 = vmatpush1.msra.mxu0 0.0
  %1459 = vmatprep.subr.mxu0 0.0
  %1460 = vmatpush1.msra.mxu0 0.0
  %1461 = vmatprep.subr.mxu0 0.0
  %1462 = vmatpush1.msra.mxu0 0.0
  %1463 = vmatprep.subr.mxu0 0.0
  %1464 = vmatpush1.msra.mxu0 0.0
  %1465 = vmatprep.subr.mxu0 0.0
  %1466 = vmatpush1.msra.mxu0 0.0
  %1467 = vmatprep.subr.mxu0 0.0
  %1468 = vmatpush1.msra.mxu0 0.0
  %1469 = vmatprep.subr.mxu0 0.0
  %1470 = vmatpush1.msra.mxu0 0.0
  %1471 = vmatprep.mubr.f32.mxu0 0.0
  %1472 = vmatmul.mubr.f32.gmra.mrb[0].mxu0 %v253
  %v1473 = vpop.f32.mrb[0].mxu0
  %v1474 = vadd.f32 0.0, %v1473
  %v1475 = vpop.f32.mrb[0].mxu0
  %1476 = vmatprep.mubr.f32.mxu0 0.0
  %1477 = vmatmul.mubr.f32.gmra.mrb[0].mxu0 %v256
  %v1478 = vpop.f32.mrb[0].mxu0
  %v1479 = vadd.f32 0.0, %v1478
  %v1480 = vpop.f32.mrb[0].mxu0
  %1481 = vmatprep.mubr.f32.mxu0 0.0
  %1482 = vmatmul.mubr.f32.gmra.mrb[0].mxu0 %v259
  %v1483 = vpop.f32.mrb[0].mxu0
  %v1484 = vadd.f32 0.0, %v1483
  %v1485 = vpop.f32.mrb[0].mxu0
  %1486 = vmatprep.mubr.f32.mxu0 0.0
  %1487 = vmatmul.mubr.f32.gmra.mrb[0].mxu0 %v262
  %v1488 = vpop.f32.mrb[0].mxu0
  %v1489 = vadd.f32 0.0, %v1488
  %v1490 = vpop.f32.mrb[0].mxu0
  %1491 = vmatprep.mubr.f32.mxu0 0.0
  %1492 = vmatmul.mubr.f32.gmra.mrb[0].mxu0 %v265
  %v1493 = vpop.f32.mrb[0].mxu0
  %v1494 = vadd.f32 0.0, %v1493
  %v1495 = vpop.f32.mrb[0].mxu0
  %1496 = vmatprep.mubr.f32.mxu0 0.0
  %1497 = vmatmul.mubr.f32.gmra.mrb[0].mxu0 %v268
  %v1498 = vpop.f32.mrb[0].mxu0
  %v1499 = vadd.f32 0.0, %v1498
  %v1500 = vpop.f32.mrb[0].mxu0
  %1501 = vmatprep.mubr.f32.mxu0 0.0
  %1502 = vmatmul.mubr.f32.gmra.mrb[0].mxu0 %v271
  %v1503 = vpop.f32.mrb[0].mxu0
  %v1504 = vadd.f32 0.0, %v1503
  %v1505 = vpop.f32.mrb[0].mxu0
  %1506 = vmatprep.mubr.f32.mxu0 0.0
  %1507 = vmatmul.mubr.f32.gmra.mrb[0].mxu0 %v274
  %v1508 = vpop.f32.mrb[0].mxu0
  %v1509 = vadd.f32 0.0, %v1508
  %v1510 = vpop.f32.mrb[0].mxu0
  %1511 = vdwg.mxu0
  %v1512 = vmul.f32 %v1474, %v87
  %v1513 = vmul.f32 %v1479, %v88
  %v1514 = vmul.f32 %v1484, %v89
  %v1515 = vmul.f32 %v1489, %v90
  %v1516 = vmul.f32 %v1494, %v91
  %v1517 = vmul.f32 %v1499, %v92
  %v1518 = vmul.f32 %v1504, %v93
  %v1519 = vmul.f32 %v1509, %v94
  %v1521 = vsel %vm105, %v1278, 0
  %v1524 = vsel %vm105, %v1279, 0
  %v1527 = vsel %vm105, %v1393, 0
  %v1530 = vsel %vm105, %v1394, 0
  %v1533 = vsel %vm105, %v1395, 0
  %v1536 = vsel %vm105, %v1396, 0
  %v1539 = vsel %vm105, %v1397, 0
  %v1542 = vsel %vm105, %v1398, 0
  %v1545 = vsel %vm105, %v1399, 0
  %v1548 = vsel %vm105, %v1400, 0
  %1550 = vmatprep.subr.mxu0 0.0
  %1551 = vmatpush1.xpose.msra.mxu0 %v1527
  %1552 = vmatprep.subr.mxu0 0.0
  %1553 = vmatpush1.xpose.msra.mxu0 %v1530
  %1554 = vmatprep.subr.mxu0 0.0
  %1555 = vmatpush1.xpose.msra.mxu0 %v1533
  %1556 = vmatprep.subr.mxu0 0.0
  %1557 = vmatpush1.xpose.msra.mxu0 %v1536
  %1558 = vmatprep.subr.mxu0 0.0
  %1559 = vmatpush1.xpose.msra.mxu0 %v1539
  %1560 = vmatprep.subr.mxu0 0.0
  %1561 = vmatpush1.xpose.msra.mxu0 %v1542
  %1562 = vmatprep.subr.mxu0 0.0
  %1563 = vmatpush1.xpose.msra.mxu0 %v1545
  %1564 = vmatprep.subr.mxu0 0.0
  %1565 = vmatpush1.xpose.msra.mxu0 %v1548
  %1566 = vmatprep.subr.mxu0 0.0
  %1567 = vmatpush1.xpose.msra.mxu0 0.0
  %1568 = vmatprep.subr.mxu0 0.0
  %1569 = vmatpush1.xpose.msra.mxu0 0.0
  %1570 = vmatprep.subr.mxu0 0.0
  %1571 = vmatpush1.xpose.msra.mxu0 0.0
  %1572 = vmatprep.subr.mxu0 0.0
  %1573 = vmatpush1.xpose.msra.mxu0 0.0
  %1574 = vmatprep.subr.mxu0 0.0
  %1575 = vmatpush1.xpose.msra.mxu0 0.0
  %1576 = vmatprep.subr.mxu0 0.0
  %1577 = vmatpush1.xpose.msra.mxu0 0.0
  %1578 = vmatprep.subr.mxu0 0.0
  %1579 = vmatpush1.xpose.msra.mxu0 0.0
  %1580 = vmatprep.subr.mxu0 0.0
  %1581 = vmatpush1.xpose.msra.mxu0 0.0
  %1582 = vmatprep.subr.mxu0 0.0
  %1583 = vmatpush1.xpose.msra.mxu0 0.0
  %1584 = vmatprep.subr.mxu0 0.0
  %1585 = vmatpush1.xpose.msra.mxu0 0.0
  %1586 = vmatprep.subr.mxu0 0.0
  %1587 = vmatpush1.xpose.msra.mxu0 0.0
  %1588 = vmatprep.subr.mxu0 0.0
  %1589 = vmatpush1.xpose.msra.mxu0 0.0
  %1590 = vmatprep.subr.mxu0 0.0
  %1591 = vmatpush1.xpose.msra.mxu0 0.0
  %1592 = vmatprep.subr.mxu0 0.0
  %1593 = vmatpush1.xpose.msra.mxu0 0.0
  %1594 = vmatprep.subr.mxu0 0.0
  %1595 = vmatpush1.xpose.msra.mxu0 0.0
  %1596 = vmatprep.subr.mxu0 0.0
  %1597 = vmatpush1.xpose.msra.mxu0 0.0
  %1598 = vmatprep.subr.mxu0 0.0
  %1599 = vmatpush1.xpose.msra.mxu0 0.0
  %1600 = vmatprep.subr.mxu0 0.0
  %1601 = vmatpush1.xpose.msra.mxu0 0.0
  %1602 = vmatprep.subr.mxu0 0.0
  %1603 = vmatpush1.xpose.msra.mxu0 0.0
  %1604 = vmatprep.subr.mxu0 0.0
  %1605 = vmatpush1.xpose.msra.mxu0 0.0
  %1606 = vmatprep.subr.mxu0 0.0
  %1607 = vmatpush1.xpose.msra.mxu0 0.0
  %1608 = vmatprep.subr.mxu0 0.0
  %1609 = vmatpush1.xpose.msra.mxu0 0.0
  %1610 = vmatprep.subr.mxu0 0.0
  %1611 = vmatpush1.xpose.msra.mxu0 0.0
  %1612 = vmatprep.subr.mxu0 0.0
  %1613 = vmatpush1.xpose.msra.mxu0 0.0
  %1614 = vmatprep.mubr.f32.mxu0 0.0
  %1615 = vmatmul.mubr.f32.gmra.mrb[0].mxu0 %v1521
  %v1616 = vpop.f32.mrb[0].mxu0
  %v1617 = vadd.f32 %v77, %v1616
  %v1618 = vpop.f32.mrb[0].mxu0
  %1619 = vmatprep.mubr.f32.mxu0 0.0
  %1620 = vmatmul.mubr.f32.gmra.mrb[0].mxu0 %v1524
  %v1621 = vpop.f32.mrb[0].mxu0
  %v1622 = vadd.f32 %v78, %v1621
  %v1623 = vpop.f32.mrb[0].mxu0
  %1624 = vdwg.mxu0
  %v1625 = vsel %vm613, %v1617, -inf
  %1626 = vmax.xlane.f32.xlu0 %v1625
  %v1627 = vpop.xlane.xlu0 %1626
  %v1628 = vsel %vm613, %v1622, -inf
  %1629 = vmax.xlane.f32.xlu0 %v1628
  %v1630 = vpop.xlane.xlu0 %1629
  %v1631 = vsub.f32 %v1617, %v1627
  %v1632 = vsub.f32 %v1622, %v1630
  %v1633 = vmul.f32 %v1631, 1.442695
  %v1634 = vpow.pop %v1633
  %v1635 = vmul.f32 %v1632, 1.442695
  %v1636 = vpow.pop %v1635
  %v1638 = vsel %vm613, %v1634, 0
  %v1641 = vsel %vm613, %v1636, 0
  %1643 = vmatprep.subr.mxu0 0.0
  %1644 = vmatpush1.msra.mxu0 %v95
  %1645 = vmatprep.subr.mxu0 0.0
  %1646 = vmatpush1.msra.mxu0 %v96
  %1647 = vmatprep.subr.mxu0 0.0
  %1648 = vmatpush1.msra.mxu0 %v97
  %1649 = vmatprep.subr.mxu0 0.0
  %1650 = vmatpush1.msra.mxu0 %v98
  %1651 = vmatprep.subr.mxu0 0.0
  %1652 = vmatpush1.msra.mxu0 %v99
  %1653 = vmatprep.subr.mxu0 0.0
  %1654 = vmatpush1.msra.mxu0 %v100
  %1655 = vmatprep.subr.mxu0 0.0
  %1656 = vmatpush1.msra.mxu0 %v101
  %1657 = vmatprep.subr.mxu0 0.0
  %1658 = vmatpush1.msra.mxu0 %v102
  %1659 = vmatprep.subr.mxu0 0.0
  %1660 = vmatpush1.msra.mxu0 0.0
  %1661 = vmatprep.subr.mxu0 0.0
  %1662 = vmatpush1.msra.mxu0 0.0
  %1663 = vmatprep.subr.mxu0 0.0
  %1664 = vmatpush1.msra.mxu0 0.0
  %1665 = vmatprep.subr.mxu0 0.0
  %1666 = vmatpush1.msra.mxu0 0.0
  %1667 = vmatprep.subr.mxu0 0.0
  %1668 = vmatpush1.msra.mxu0 0.0
  %1669 = vmatprep.subr.mxu0 0.0
  %1670 = vmatpush1.msra.mxu0 0.0
  %1671 = vmatprep.subr.mxu0 0.0
  %1672 = vmatpush1.msra.mxu0 0.0
  %1673 = vmatprep.subr.mxu0 0.0
  %1674 = vmatpush1.msra.mxu0 0.0
  %1675 = vmatprep.subr.mxu0 0.0
  %1676 = vmatpush1.msra.mxu0 0.0
  %1677 = vmatprep.subr.mxu0 0.0
  %1678 = vmatpush1.msra.mxu0 0.0
  %1679 = vmatprep.subr.mxu0 0.0
  %1680 = vmatpush1.msra.mxu0 0.0
  %1681 = vmatprep.subr.mxu0 0.0
  %1682 = vmatpush1.msra.mxu0 0.0
  %1683 = vmatprep.subr.mxu0 0.0
  %1684 = vmatpush1.msra.mxu0 0.0
  %1685 = vmatprep.subr.mxu0 0.0
  %1686 = vmatpush1.msra.mxu0 0.0
  %1687 = vmatprep.subr.mxu0 0.0
  %1688 = vmatpush1.msra.mxu0 0.0
  %1689 = vmatprep.subr.mxu0 0.0
  %1690 = vmatpush1.msra.mxu0 0.0
  %1691 = vmatprep.subr.mxu0 0.0
  %1692 = vmatpush1.msra.mxu0 0.0
  %1693 = vmatprep.subr.mxu0 0.0
  %1694 = vmatpush1.msra.mxu0 0.0
  %1695 = vmatprep.subr.mxu0 0.0
  %1696 = vmatpush1.msra.mxu0 0.0
  %1697 = vmatprep.subr.mxu0 0.0
  %1698 = vmatpush1.msra.mxu0 0.0
  %1699 = vmatprep.subr.mxu0 0.0
  %1700 = vmatpush1.msra.mxu0 0.0
  %1701 = vmatprep.subr.mxu0 0.0
  %1702 = vmatpush1.msra.mxu0 0.0
  %1703 = vmatprep.subr.mxu0 0.0
  %1704 = vmatpush1.msra.mxu0 0.0
  %1705 = vmatprep.subr.mxu0 0.0
  %1706 = vmatpush1.msra.mxu0 0.0
  %1707 = vmatprep.mubr.f32.mxu0 0.0
  %1708 = vmatmul.mubr.f32.gmra.mrb[0].mxu0 %v1638
  %v1709 = vpop.f32.mrb[0].mxu0
  %v1710 = vadd.f32 0.0, %v1709
  %v1711 = vpop.f32.mrb[0].mxu0
  %1712 = vmatprep.mubr.f32.mxu0 0.0
  %1713 = vmatmul.mubr.f32.gmra.mrb[0].mxu0 %v1641
  %v1714 = vpop.f32.mrb[0].mxu0
  %v1715 = vadd.f32 0.0, %v1714
  %v1716 = vpop.f32.mrb[0].mxu0
  %1717 = vdwg.mxu0
  %v1718 = vrcp.pop %v1710
  %v1719 = vrcp.pop %v1715
  %v1720 = vmul.f32 %v1634, %v1718
  %v1721 = vmul.f32 %v1636, %v1719
  %v1723 = vsel %vm613, %v1720, 0
  %v1726 = vsel %vm613, %v1721, 0
  %1728 = vmatprep.subr.mxu0 0.0
  %1729 = vmatpush1.msra.mxu0 %v1512
  %1730 = vmatprep.subr.mxu0 0.0
  %1731 = vmatpush1.msra.mxu0 %v1513
  %1732 = vmatprep.subr.mxu0 0.0
  %1733 = vmatpush1.msra.mxu0 %v1514
  %1734 = vmatprep.subr.mxu0 0.0
  %1735 = vmatpush1.msra.mxu0 %v1515
  %1736 = vmatprep.subr.mxu0 0.0
  %1737 = vmatpush1.msra.mxu0 %v1516
  %1738 = vmatprep.subr.mxu0 0.0
  %1739 = vmatpush1.msra.mxu0 %v1517
  %1740 = vmatprep.subr.mxu0 0.0
  %1741 = vmatpush1.msra.mxu0 %v1518
  %1742 = vmatprep.subr.mxu0 0.0
  %1743 = vmatpush1.msra.mxu0 %v1519
  %1744 = vmatprep.subr.mxu0 0.0
  %1745 = vmatpush1.msra.mxu0 0.0
  %1746 = vmatprep.subr.mxu0 0.0
  %1747 = vmatpush1.msra.mxu0 0.0
  %1748 = vmatprep.subr.mxu0 0.0
  %1749 = vmatpush1.msra.mxu0 0.0
  %1750 = vmatprep.subr.mxu0 0.0
  %1751 = vmatpush1.msra.mxu0 0.0
  %1752 = vmatprep.subr.mxu0 0.0
  %1753 = vmatpush1.msra.mxu0 0.0
  %1754 = vmatprep.subr.mxu0 0.0
  %1755 = vmatpush1.msra.mxu0 0.0
  %1756 = vmatprep.subr.mxu0 0.0
  %1757 = vmatpush1.msra.mxu0 0.0
  %1758 = vmatprep.subr.mxu0 0.0
  %1759 = vmatpush1.msra.mxu0 0.0
  %1760 = vmatprep.subr.mxu0 0.0
  %1761 = vmatpush1.msra.mxu0 0.0
  %1762 = vmatprep.subr.mxu0 0.0
  %1763 = vmatpush1.msra.mxu0 0.0
  %1764 = vmatprep.subr.mxu0 0.0
  %1765 = vmatpush1.msra.mxu0 0.0
  %1766 = vmatprep.subr.mxu0 0.0
  %1767 = vmatpush1.msra.mxu0 0.0
  %1768 = vmatprep.subr.mxu0 0.0
  %1769 = vmatpush1.msra.mxu0 0.0
  %1770 = vmatprep.subr.mxu0 0.0
  %1771 = vmatpush1.msra.mxu0 0.0
  %1772 = vmatprep.subr.mxu0 0.0
  %1773 = vmatpush1.msra.mxu0 0.0
  %1774 = vmatprep.subr.mxu0 0.0
  %1775 = vmatpush1.msra.mxu0 0.0
  %1776 = vmatprep.subr.mxu0 0.0
  %1777 = vmatpush1.msra.mxu0 0.0
  %1778 = vmatprep.subr.mxu0 0.0
  %1779 = vmatpush1.msra.mxu0 0.0
  %1780 = vmatprep.subr.mxu0 0.0
  %1781 = vmatpush1.msra.mxu0 0.0
  %1782 = vmatprep.subr.mxu0 0.0
  %1783 = vmatpush1.msra.mxu0 0.0
  %1784 = vmatprep.subr.mxu0 0.0
  %1785 = vmatpush1.msra.mxu0 0.0
  %1786 = vmatprep.subr.mxu0 0.0
  %1787 = vmatpush1.msra.mxu0 0.0
  %1788 = vmatprep.subr.mxu0 0.0
  %1789 = vmatpush1.msra.mxu0 0.0
  %1790 = vmatprep.subr.mxu0 0.0
  %1791 = vmatpush1.msra.mxu0 0.0
  %1792 = vmatprep.mubr.f32.mxu0 0.0
  %1793 = vmatmul.mubr.f32.gmra.mrb[0].mxu0 %v1723
  %v1794 = vpop.f32.mrb[0].mxu0
  %v1795 = vadd.f32 0.0, %v1794
  %v1796 = vpop.f32.mrb[0].mxu0
  %1797 = vmatprep.mubr.f32.mxu0 0.0
  %1798 = vmatmul.mubr.f32.gmra.mrb[0].mxu0 %v1726
  %v1799 = vpop.f32.mrb[0].mxu0
  %v1800 = vadd.f32 0.0, %v1799
  %v1801 = vpop.f32.mrb[0].mxu0
  %1802 = vdwg.mxu0
  %s1803 = scalar_lea.vmem %s11, 32
  %v1804 = vld [vmem:[%s1803] sm:$0xff]
  %v1805 = vld [vmem:[%s1803 + $0x8] sm:$0xff]
  %v1806 = vld [vmem:[%s1803 + $0x10] sm:$0xff]
  %v1807 = vld [vmem:[%s1803 + $0x18] sm:$0xff]
  %s1808 = scalar_lea.vmem %s12, 1
  %v1809 = vld [vmem:[%s1808] sm:$0x1]
  %v1811 = vlaneseq
  %v1812 = vshrl.u32 %v1811, 7
  %v1813 = vsub.s32 0, %v1812
  %v1814 = vrot.slane %v1809, %v1813
  %v1817 = vsel %vm105, %v1795, 0
  %v1820 = vsel %vm105, %v1800, 0
  %1822 = vmatprep.subr.mxu0 0.0
  %1823 = vmatpush1.msra.mxu0 %v1804
  %1824 = vmatprep.subr.mxu0 0.0
  %1825 = vmatpush1.msra.mxu0 %v1805
  %1826 = vmatprep.subr.mxu0 0.0
  %1827 = vmatpush1.msra.mxu0 %v1806
  %1828 = vmatprep.subr.mxu0 0.0
  %1829 = vmatpush1.msra.mxu0 %v1807
  %1830 = vmatprep.subr.mxu0 0.0
  %1831 = vmatpush1.msra.mxu0 0.0
  %1832 = vmatprep.subr.mxu0 0.0
  %1833 = vmatpush1.msra.mxu0 0.0
  %1834 = vmatprep.subr.mxu0 0.0
  %1835 = vmatpush1.msra.mxu0 0.0
  %1836 = vmatprep.subr.mxu0 0.0
  %1837 = vmatpush1.msra.mxu0 0.0
  %1838 = vmatprep.subr.mxu0 0.0
  %1839 = vmatpush1.msra.mxu0 0.0
  %1840 = vmatprep.subr.mxu0 0.0
  %1841 = vmatpush1.msra.mxu0 0.0
  %1842 = vmatprep.subr.mxu0 0.0
  %1843 = vmatpush1.msra.mxu0 0.0
  %1844 = vmatprep.subr.mxu0 0.0
  %1845 = vmatpush1.msra.mxu0 0.0
  %1846 = vmatprep.subr.mxu0 0.0
  %1847 = vmatpush1.msra.mxu0 0.0
  %1848 = vmatprep.subr.mxu0 0.0
  %1849 = vmatpush1.msra.mxu0 0.0
  %1850 = vmatprep.subr.mxu0 0.0
  %1851 = vmatpush1.msra.mxu0 0.0
  %1852 = vmatprep.subr.mxu0 0.0
  %1853 = vmatpush1.msra.mxu0 0.0
  %1854 = vmatprep.subr.mxu0 0.0
  %1855 = vmatpush1.msra.mxu0 0.0
  %1856 = vmatprep.subr.mxu0 0.0
  %1857 = vmatpush1.msra.mxu0 0.0
  %1858 = vmatprep.subr.mxu0 0.0
  %1859 = vmatpush1.msra.mxu0 0.0
  %1860 = vmatprep.subr.mxu0 0.0
  %1861 = vmatpush1.msra.mxu0 0.0
  %1862 = vmatprep.subr.mxu0 0.0
  %1863 = vmatpush1.msra.mxu0 0.0
  %1864 = vmatprep.subr.mxu0 0.0
  %1865 = vmatpush1.msra.mxu0 0.0
  %1866 = vmatprep.subr.mxu0 0.0
  %1867 = vmatpush1.msra.mxu0 0.0
  %1868 = vmatprep.subr.mxu0 0.0
  %1869 = vmatpush1.msra.mxu0 0.0
  %1870 = vmatprep.subr.mxu0 0.0
  %1871 = vmatpush1.msra.mxu0 0.0
  %1872 = vmatprep.subr.mxu0 0.0
  %1873 = vmatpush1.msra.mxu0 0.0
  %1874 = vmatprep.subr.mxu0 0.0
  %1875 = vmatpush1.msra.mxu0 0.0
  %1876 = vmatprep.subr.mxu0 0.0
  %1877 = vmatpush1.msra.mxu0 0.0
  %1878 = vmatprep.subr.mxu0 0.0
  %1879 = vmatpush1.msra.mxu0 0.0
  %1880 = vmatprep.subr.mxu0 0.0
  %1881 = vmatpush1.msra.mxu0 0.0
  %1882 = vmatprep.subr.mxu0 0.0
  %1883 = vmatpush1.msra.mxu0 0.0
  %1884 = vmatprep.subr.mxu0 0.0
  %1885 = vmatpush1.msra.mxu0 0.0
  %1886 = vmatprep.mubr.f32.mxu0 0.0
  %1887 = vmatmul.mubr.f32.gmra.mrb[0].mxu0 %v1817
  %v1888 = vpop.f32.mrb[0].mxu0
  %v1889 = vadd.f32 %v1814, %v1888
  %v1890 = vpop.f32.mrb[0].mxu0
  %1891 = vmatprep.mubr.f32.mxu0 0.0
  %1892 = vmatmul.mubr.f32.gmra.mrb[0].mxu0 %v1820
  %v1893 = vpop.f32.mrb[0].mxu0
  %v1894 = vadd.f32 %v1814, %v1893
  %v1895 = vpop.f32.mrb[0].mxu0
  %1896 = vdwg.mxu0
  %v1897 = vadd.f32 %v1136, %v1889
  %v1898 = vadd.f32 %v1137, %v1894
  %s1899 = scalar_lea.vmem %s13, 1
  %v1900 = vld [vmem:[%s1899] sm:$0x1]
  %s1901 = scalar_lea.vmem %s14, 1
  %v1902 = vld [vmem:[%s1901] sm:$0x1]
  %v1903 = vsel %vm105, %v1897, 0.0
  %1904 = vadd.xlane.f32.xlu0 %v1903
  %v1905 = vpop.xlane.xlu0 %1904
  %v1906 = vsel %vm105, %v1898, 0.0
  %1907 = vadd.xlane.f32.xlu0 %v1906
  %v1908 = vpop.xlane.xlu0 %1907
  %v1909 = vmul.f32 %v1905, %v112
  %v1910 = vmul.f32 %v1908, %v112
  %v1911 = vsub.f32 %v1897, %v1909
  %v1912 = vsub.f32 %v1898, %v1910
  %v1913 = vmul.f32 %v1911, %v1911
  %v1914 = vmul.f32 %v1912, %v1912
  %v1915 = vsel %vm105, %v1913, 0.0
  %1916 = vadd.xlane.f32.xlu0 %v1915
  %v1917 = vpop.xlane.xlu0 %1916
  %v1918 = vsel %vm105, %v1914, 0.0
  %1919 = vadd.xlane.f32.xlu0 %v1918
  %v1920 = vpop.xlane.xlu0 %1919
  %v1921 = vmul.f32 %v1917, %v112
  %v1922 = vmul.f32 %v1920, %v112
  %v1923 = vadd.f32 %v1921, 1e-05
  %v1924 = vadd.f32 %v1922, 1e-05
  %v1925 = vrsqrt.pop %v1923
  %v1926 = vrsqrt.pop %v1924
  %v1927 = vmul.f32 %v1911, %v1925
  %v1928 = vmul.f32 %v1912, %v1926
  %v1930 = vlaneseq
  %v1931 = vshrl.u32 %v1930, 7
  %v1932 = vsub.s32 0, %v1931
  %v1933 = vrot.slane %v1900, %v1932
  %v1935 = vmul.f32 %v1927, %v1933
  %v1936 = vmul.f32 %v1928, %v1933
  %v1938 = vlaneseq
  %v1939 = vshrl.u32 %v1938, 7
  %v1940 = vsub.s32 0, %v1939
  %v1941 = vrot.slane %v1902, %v1940
  %v1943 = vadd.f32 %v1935, %v1941
  %v1944 = vadd.f32 %v1936, %v1941
  %s1945 = scalar_lea.vmem %s15, 32
  %v1946 = vld [vmem:[%s1945] sm:$0xff]
  %v1947 = vld [vmem:[%s1945 + $0x8] sm:$0xff]
  %v1948 = vld [vmem:[%s1945 + $0x10] sm:$0xff]
  %v1949 = vld [vmem:[%s1945 + $0x18] sm:$0xff]
  %s1950 = scalar_lea.vmem %s16, 1
  %v1951 = vld [vmem:[%s1950] sm:$0x1]
  %v1953 = vlaneseq
  %v1954 = vshrl.u32 %v1953, 7
  %v1955 = vsub.s32 0, %v1954
  %v1956 = vrot.slane %v1951, %v1955
  %v1959 = vsel %vm105, %v1943, 0
  %v1962 = vsel %vm105, %v1944, 0
  %1964 = vmatprep.subr.mxu0 0.0
  %1965 = vmatpush1.msra.mxu0 %v1946
  %1966 = vmatprep.subr.mxu0 0.0
  %1967 = vmatpush1.msra.mxu0 %v1947
  %1968 = vmatprep.subr.mxu0 0.0
  %1969 = vmatpush1.msra.mxu0 %v1948
  %1970 = vmatprep.subr.mxu0 0.0
  %1971 = vmatpush1.msra.mxu0 %v1949
  %1972 = vmatprep.subr.mxu0 0.0
  %1973 = vmatpush1.msra.mxu0 0.0
  %1974 = vmatprep.subr.mxu0 0.0
  %1975 = vmatpush1.msra.mxu0 0.0
  %1976 = vmatprep.subr.mxu0 0.0
  %1977 = vmatpush1.msra.mxu0 0.0
  %1978 = vmatprep.subr.mxu0 0.0
  %1979 = vmatpush1.msra.mxu0 0.0
  %1980 = vmatprep.subr.mxu0 0.0
  %1981 = vmatpush1.msra.mxu0 0.0
  %1982 = vmatprep.subr.mxu0 0.0
  %1983 = vmatpush1.msra.mxu0 0.0
  %1984 = vmatprep.subr.mxu0 0.0
  %1985 = vmatpush1.msra.mxu0 0.0
  %1986 = vmatprep.subr.mxu0 0.0
  %1987 = vmatpush1.msra.mxu0 0.0
  %1988 = vmatprep.subr.mxu0 0.0
  %1989 = vmatpush1.msra.mxu0 0.0
  %1990 = vmatprep.subr.mxu0 0.0
  %1991 = vmatpush1.msra.mxu0 0.0
  %1992 = vmatprep.subr.mxu0 0.0
  %1993 = vmatpush1.msra.mxu0 0.0
  %1994 = vmatprep.subr.mxu0 0.0
  %1995 = vmatpush1.msra.mxu0 0.0
  %1996 = vmatprep.subr.mxu0 0.0
  %1997 = vmatpush1.msra.mxu0 0.0
  %1998 = vmatprep.subr.mxu0 0.0
  %1999 = vmatpush1.msra.mxu0 0.0
  %2000 = vmatprep.subr.mxu0 0.0
  %2001 = vmatpush1.msra.mxu0 0.0
  %2002 = vmatprep.subr.mxu0 0.0
  %2003 = vmatpush1.msra.mxu0 0.0
  %2004 = vmatprep.subr.mxu0 0.0
  %2005 = vmatpush1.msra.mxu0 0.0
  %2006 = vmatprep.subr.mxu0 0.0
  %2007 = vmatpush1.msra.mxu0 0.0
  %2008 = vmatprep.subr.mxu0 0.0
  %2009 = vmatpush1.msra.mxu0 0.0
  %2010 = vmatprep.subr.mxu0 0.0
  %2011 = vmatpush1.msra.mxu0 0.0
  %2012 = vmatprep.subr.mxu0 0.0
  %2013 = vmatpush1.msra.mxu0 0.0
  %2014 = vmatprep.subr.mxu0 0.0
  %2015 = vmatpush1.msra.mxu0 0.0
  %2016 = vmatprep.subr.mxu0 0.0
  %2017 = vmatpush1.msra.mxu0 0.0
  %2018 = vmatprep.subr.mxu0 0.0
  %2019 = vmatpush1.msra.mxu0 0.0
  %2020 = vmatprep.subr.mxu0 0.0
  %2021 = vmatpush1.msra.mxu0 0.0
  %2022 = vmatprep.subr.mxu0 0.0
  %2023 = vmatpush1.msra.mxu0 0.0
  %2024 = vmatprep.subr.mxu0 0.0
  %2025 = vmatpush1.msra.mxu0 0.0
  %2026 = vmatprep.subr.mxu0 0.0
  %2027 = vmatpush1.msra.mxu0 0.0
  %2028 = vmatprep.mubr.f32.mxu0 0.0
  %2029 = vmatmul.mubr.f32.gmra.mrb[0].mxu0 %v1959
  %v2030 = vpop.f32.mrb[0].mxu0
  %v2031 = vadd.f32 %v1956, %v2030
  %v2032 = vpop.f32.mrb[0].mxu0
  %2033 = vmatprep.mubr.f32.mxu0 0.0
  %2034 = vmatmul.mubr.f32.gmra.mrb[0].mxu0 %v1962
  %v2035 = vpop.f32.mrb[0].mxu0
  %v2036 = vadd.f32 %v1956, %v2035
  %v2037 = vpop.f32.mrb[0].mxu0
  %2038 = vdwg.mxu0
  %v2039 = vmul.f32 %v2031, 1.702
  %v2040 = vmul.f32 %v2036, 1.702
  %v2041 = vxor.u32 %v2039, 2147483648
  %v2042 = vxor.u32 %v2040, 2147483648
  %v2043 = vmul.f32 %v2041, 1.442695
  %v2044 = vpow.pop %v2043
  %v2045 = vmul.f32 %v2042, 1.442695
  %v2046 = vpow.pop %v2045
  %v2047 = vadd.f32 %v2044, 1.0
  %v2048 = vadd.f32 %v2046, 1.0
  %v2049 = vrcp.pop %v2047
  %v2050 = vmul.f32 1.0, %v2049
  %v2051 = vrcp.pop %v2048
  %v2052 = vmul.f32 1.0, %v2051
  %v2053 = vmul.f32 %v2031, %v2050
  %v2054 = vmul.f32 %v2036, %v2052
  %s2055 = scalar_lea.vmem %s17, 128
  %v2056 = vld [vmem:[%s2055] sm:$0xff]
  %v2057 = vld [vmem:[%s2055 + $0x8] sm:$0xff]
  %v2058 = vld [vmem:[%s2055 + $0x10] sm:$0xff]
  %v2059 = vld [vmem:[%s2055 + $0x18] sm:$0xff]
  %v2060 = vld [vmem:[%s2055 + $0x20] sm:$0xff]
  %v2061 = vld [vmem:[%s2055 + $0x28] sm:$0xff]
  %v2062 = vld [vmem:[%s2055 + $0x30] sm:$0xff]
  %v2063 = vld [vmem:[%s2055 + $0x38] sm:$0xff]
  %v2064 = vld [vmem:[%s2055 + $0x40] sm:$0xff]
  %v2065 = vld [vmem:[%s2055 + $0x48] sm:$0xff]
  %v2066 = vld [vmem:[%s2055 + $0x50] sm:$0xff]
  %v2067 = vld [vmem:[%s2055 + $0x58] sm:$0xff]
  %v2068 = vld [vmem:[%s2055 + $0x60] sm:$0xff]
  %v2069 = vld [vmem:[%s2055 + $0x68] sm:$0xff]
  %v2070 = vld [vmem:[%s2055 + $0x70] sm:$0xff]
  %v2071 = vld [vmem:[%s2055 + $0x78] sm:$0xff]
  %s2072 = scalar_lea.vmem %s18, 1
  %v2073 = vld [vmem:[%s2072] sm:$0x1]
  %v2075 = vlaneseq
  %v2076 = vshrl.u32 %v2075, 7
  %v2077 = vsub.s32 0, %v2076
  %v2078 = vrot.slane %v2073, %v2077
  %2080 = vmatprep.subr.mxu0 0.0
  %2081 = vmatpush1.msra.mxu0 %v2056
  %2082 = vmatprep.subr.mxu0 0.0
  %2083 = vmatpush1.msra.mxu0 %v2057
  %2084 = vmatprep.subr.mxu0 0.0
  %2085 = vmatpush1.msra.mxu0 %v2058
  %2086 = vmatprep.subr.mxu0 0.0
  %2087 = vmatpush1.msra.mxu0 %v2059
  %2088 = vmatprep.subr.mxu0 0.0
  %2089 = vmatpush1.msra.mxu0 %v2060
  %2090 = vmatprep.subr.mxu0 0.0
  %2091 = vmatpush1.msra.mxu0 %v2061
  %2092 = vmatprep.subr.mxu0 0.0
  %2093 = vmatpush1.msra.mxu0 %v2062
  %2094 = vmatprep.subr.mxu0 0.0
  %2095 = vmatpush1.msra.mxu0 %v2063
  %2096 = vmatprep.subr.mxu0 0.0
  %2097 = vmatpush1.msra.mxu0 %v2064
  %2098 = vmatprep.subr.mxu0 0.0
  %2099 = vmatpush1.msra.mxu0 %v2065
  %2100 = vmatprep.subr.mxu0 0.0
  %2101 = vmatpush1.msra.mxu0 %v2066
  %2102 = vmatprep.subr.mxu0 0.0
  %2103 = vmatpush1.msra.mxu0 %v2067
  %2104 = vmatprep.subr.mxu0 0.0
  %2105 = vmatpush1.msra.mxu0 %v2068
  %2106 = vmatprep.subr.mxu0 0.0
  %2107 = vmatpush1.msra.mxu0 %v2069
  %2108 = vmatprep.subr.mxu0 0.0
  %2109 = vmatpush1.msra.mxu0 %v2070
  %2110 = vmatprep.subr.mxu0 0.0
  %2111 = vmatpush1.msra.mxu0 %v2071
  %2112 = vmatprep.subr.mxu0 0.0
  %2113 = vmatpush1.msra.mxu0 0.0
  %2114 = vmatprep.subr.mxu0 0.0
  %2115 = vmatpush1.msra.mxu0 0.0
  %2116 = vmatprep.subr.mxu0 0.0
  %2117 = vmatpush1.msra.mxu0 0.0
  %2118 = vmatprep.subr.mxu0 0.0
  %2119 = vmatpush1.msra.mxu0 0.0
  %2120 = vmatprep.subr.mxu0 0.0
  %2121 = vmatpush1.msra.mxu0 0.0
  %2122 = vmatprep.subr.mxu0 0.0
  %2123 = vmatpush1.msra.mxu0 0.0
  %2124 = vmatprep.subr.mxu0 0.0
  %2125 = vmatpush1.msra.mxu0 0.0
  %2126 = vmatprep.subr.mxu0 0.0
  %2127 = vmatpush1.msra.mxu0 0.0
  %2128 = vmatprep.subr.mxu0 0.0
  %2129 = vmatpush1.msra.mxu0 0.0
  %2130 = vmatprep.subr.mxu0 0.0
  %2131 = vmatpush1.msra.mxu0 0.0
  %2132 = vmatprep.subr.mxu0 0.0
  %2133 = vmatpush1.msra.mxu0 0.0
  %2134 = vmatprep.subr.mxu0 0.0
  %2135 = vmatpush1.msra.mxu0 0.0
  %2136 = vmatprep.subr.mxu0 0.0
  %2137 = vmatpush1.msra.mxu0 0.0
  %2138 = vmatprep.subr.mxu0 0.0
  %2139 = vmatpush1.msra.mxu0 0.0
  %2140 = vmatprep.subr.mxu0 0.0
  %2141 = vmatpush1.msra.mxu0 0.0
  %2142 = vmatprep.subr.mxu0 0.0
  %2143 = vmatpush1.msra.mxu0 0.0
  %2144 = vmatprep.mubr.f32.mxu0 0.0
  %2145 = vmatmul.mubr.f32.gmra.mrb[0].mxu0 %v2053
  %v2146 = vpop.f32.mrb[0].mxu0
  %v2147 = vadd.f32 %v2078, %v2146
  %v2148 = vpop.f32.mrb[0].mxu0
  %2149 = vmatprep.mubr.f32.mxu0 0.0
  %2150 = vmatmul.mubr.f32.gmra.mrb[0].mxu0 %v2054
  %v2151 = vpop.f32.mrb[0].mxu0
  %v2152 = vadd.f32 %v2078, %v2151
  %v2153 = vpop.f32.mrb[0].mxu0
  %2154 = vdwg.mxu0
  %v2155 = vadd.f32 %v1897, %v2147
  %v2156 = vadd.f32 %v1898, %v2152
  %v2157 = vld [vmem:[%s19] sm:$0x1]
  %v2158 = vld [vmem:[%s20] sm:$0x1]
  %v2159 = vsel %vm105, %v2155, 0.0
  %2160 = vadd.xlane.f32.xlu0 %v2159
  %v2161 = vpop.xlane.xlu0 %2160
  %v2162 = vsel %vm105, %v2156, 0.0
  %2163 = vadd.xlane.f32.xlu0 %v2162
  %v2164 = vpop.xlane.xlu0 %2163
  %v2165 = vmul.f32 %v2161, %v112
  %v2166 = vmul.f32 %v2164, %v112
  %v2167 = vsub.f32 %v2155, %v2165
  %v2168 = vsub.f32 %v2156, %v2166
  %v2169 = vmul.f32 %v2167, %v2167
  %v2170 = vmul.f32 %v2168, %v2168
  %v2171 = vsel %vm105, %v2169, 0.0
  %2172 = vadd.xlane.f32.xlu0 %v2171
  %v2173 = vpop.xlane.xlu0 %2172
  %v2174 = vsel %vm105, %v2170, 0.0
  %2175 = vadd.xlane.f32.xlu0 %v2174
  %v2176 = vpop.xlane.xlu0 %2175
  %v2177 = vmul.f32 %v2173, %v112
  %v2178 = vmul.f32 %v2176, %v112
  %v2179 = vadd.f32 %v2177, 1e-05
  %v2180 = vadd.f32 %v2178, 1e-05
  %v2181 = vrsqrt.pop %v2179
  %v2182 = vrsqrt.pop %v2180
  %v2183 = vmul.f32 %v2167, %v2181
  %v2184 = vmul.f32 %v2168, %v2182
  %v2186 = vlaneseq
  %v2187 = vshrl.u32 %v2186, 7
  %v2188 = vsub.s32 0, %v2187
  %v2189 = vrot.slane %v2157, %v2188
  %v2191 = vmul.f32 %v2183, %v2189
  %v2192 = vmul.f32 %v2184, %v2189
  %v2194 = vlaneseq
  %v2195 = vshrl.u32 %v2194, 7
  %v2196 = vsub.s32 0, %v2195
  %v2197 = vrot.slane %v2158, %v2196
  %v2199 = vadd.f32 %v2191, %v2197
  %v2200 = vadd.f32 %v2192, %v2197
  %v2201 = vld [vmem:[%s6] sm:$0xff]
  %v2203 = vsel %vm251, %v2201, 0
  %2205 = vmatprep.subr.mxu0 0.0
  %2206 = vmatpush1.msra.mxu0 %v2199
  %2207 = vmatprep.subr.mxu0 0.0
  %2208 = vmatpush1.msra.mxu0 %v2200
  %2209 = vmatprep.subr.mxu0 0.0
  %2210 = vmatpush1.msra.mxu0 0.0
  %2211 = vmatprep.subr.mxu0 0.0
  %2212 = vmatpush1.msra.mxu0 0.0
  %2213 = vmatprep.subr.mxu0 0.0
  %2214 = vmatpush1.msra.mxu0 0.0
  %2215 = vmatprep.subr.mxu0 0.0
  %2216 = vmatpush1.msra.mxu0 0.0
  %2217 = vmatprep.subr.mxu0 0.0
  %2218 = vmatpush1.msra.mxu0 0.0
  %2219 = vmatprep.subr.mxu0 0.0
  %2220 = vmatpush1.msra.mxu0 0.0
  %2221 = vmatprep.subr.mxu0 0.0
  %2222 = vmatpush1.msra.mxu0 0.0
  %2223 = vmatprep.subr.mxu0 0.0
  %2224 = vmatpush1.msra.mxu0 0.0
  %2225 = vmatprep.subr.mxu0 0.0
  %2226 = vmatpush1.msra.mxu0 0.0
  %2227 = vmatprep.subr.mxu0 0.0
  %2228 = vmatpush1.msra.mxu0 0.0
  %2229 = vmatprep.subr.mxu0 0.0
  %2230 = vmatpush1.msra.mxu0 0.0
  %2231 = vmatprep.subr.mxu0 0.0
  %2232 = vmatpush1.msra.mxu0 0.0
  %2233 = vmatprep.subr.mxu0 0.0
  %2234 = vmatpush1.msra.mxu0 0.0
  %2235 = vmatprep.subr.mxu0 0.0
  %2236 = vmatpush1.msra.mxu0 0.0
  %2237 = vmatprep.subr.mxu0 0.0
  %2238 = vmatpush1.msra.mxu0 0.0
  %2239 = vmatprep.subr.mxu0 0.0
  %2240 = vmatpush1.msra.mxu0 0.0
  %2241 = vmatprep.subr.mxu0 0.0
  %2242 = vmatpush1.msra.mxu0 0.0
  %2243 = vmatprep.subr.mxu0 0.0
  %2244 = vmatpush1.msra.mxu0 0.0
  %2245 = vmatprep.subr.mxu0 0.0
  %2246 = vmatpush1.msra.mxu0 0.0
  %2247 = vmatprep.subr.mxu0 0.0
  %2248 = vmatpush1.msra.mxu0 0.0
  %2249 = vmatprep.subr.mxu0 0.0
  %2250 = vmatpush1.msra.mxu0 0.0
  %2251 = vmatprep.subr.mxu0 0.0
  %2252 = vmatpush1.msra.mxu0 0.0
  %2253 = vmatprep.subr.mxu0 0.0
  %2254 = vmatpush1.msra.mxu0 0.0
  %2255 = vmatprep.subr.mxu0 0.0
  %2256 = vmatpush1.msra.mxu0 0.0
  %2257 = vmatprep.subr.mxu0 0.0
  %2258 = vmatpush1.msra.mxu0 0.0
  %2259 = vmatprep.subr.mxu0 0.0
  %2260 = vmatpush1.msra.mxu0 0.0
  %2261 = vmatprep.subr.mxu0 0.0
  %2262 = vmatpush1.msra.mxu0 0.0
  %2263 = vmatprep.subr.mxu0 0.0
  %2264 = vmatpush1.msra.mxu0 0.0
  %2265 = vmatprep.subr.mxu0 0.0
  %2266 = vmatpush1.msra.mxu0 0.0
  %2267 = vmatprep.subr.mxu0 0.0
  %2268 = vmatpush1.msra.mxu0 0.0
  %2269 = vmatprep.mubr.f32.mxu0 0.0
  %2270 = vmatmul.mubr.f32.gmra.mrb[0].mxu0 %v2203
  %v2271 = vpop.f32.mrb[0].mxu0
  %v2272 = vadd.f32 0.0, %v2271
  %v2273 = vpop.f32.mrb[0].mxu0
  %2274 = vdwg.mxu0
  %v2275 = vld [vmem:[%s21] sm:$0xff]
  %v2276 = vld [vmem:[%s21 + $0x8] sm:$0xff]
  %v2277 = vld [vmem:[%s21 + $0x10] sm:$0xff]
  %v2278 = vld [vmem:[%s21 + $0x18] sm:$0xff]
  %v2280 = vsel %vm105, %v2272, 0
  %2282 = vmatprep.subr.mxu0 0.0
  %2283 = vmatpush1.msra.mxu0 %v2275
  %2284 = vmatprep.subr.mxu0 0.0
  %2285 = vmatpush1.msra.mxu0 %v2276
  %2286 = vmatprep.subr.mxu0 0.0
  %2287 = vmatpush1.msra.mxu0 %v2277
  %2288 = vmatprep.subr.mxu0 0.0
  %2289 = vmatpush1.msra.mxu0 %v2278
  %2290 = vmatprep.subr.mxu0 0.0
  %2291 = vmatpush1.msra.mxu0 0.0
  %2292 = vmatprep.subr.mxu0 0.0
  %2293 = vmatpush1.msra.mxu0 0.0
  %2294 = vmatprep.subr.mxu0 0.0
  %2295 = vmatpush1.msra.mxu0 0.0
  %2296 = vmatprep.subr.mxu0 0.0
  %2297 = vmatpush1.msra.mxu0 0.0
  %2298 = vmatprep.subr.mxu0 0.0
  %2299 = vmatpush1.msra.mxu0 0.0
  %2300 = vmatprep.subr.mxu0 0.0
  %2301 = vmatpush1.msra.mxu0 0.0
  %2302 = vmatprep.subr.mxu0 0.0
  %2303 = vmatpush1.msra.mxu0 0.0
  %2304 = vmatprep.subr.mxu0 0.0
  %2305 = vmatpush1.msra.mxu0 0.0
  %2306 = vmatprep.subr.mxu0 0.0
  %2307 = vmatpush1.msra.mxu0 0.0
  %2308 = vmatprep.subr.mxu0 0.0
  %2309 = vmatpush1.msra.mxu0 0.0
  %2310 = vmatprep.subr.mxu0 0.0
  %2311 = vmatpush1.msra.mxu0 0.0
  %2312 = vmatprep.subr.mxu0 0.0
  %2313 = vmatpush1.msra.mxu0 0.0
  %2314 = vmatprep.subr.mxu0 0.0
  %2315 = vmatpush1.msra.mxu0 0.0
  %2316 = vmatprep.subr.mxu0 0.0
  %2317 = vmatpush1.msra.mxu0 0.0
  %2318 = vmatprep.subr.mxu0 0.0
  %2319 = vmatpush1.msra.mxu0 0.0
  %2320 = vmatprep.subr.mxu0 0.0
  %2321 = vmatpush1.msra.mxu0 0.0
  %2322 = vmatprep.subr.mxu0 0.0
  %2323 = vmatpush1.msra.mxu0 0.0
  %2324 = vmatprep.subr.mxu0 0.0
  %2325 = vmatpush1.msra.mxu0 0.0
  %2326 = vmatprep.subr.mxu0 0.0
  %2327 = vmatpush1.msra.mxu0 0.0
  %2328 = vmatprep.subr.mxu0 0.0
  %2329 = vmatpush1.msra.mxu0 0.0
  %2330 = vmatprep.subr.mxu0 0.0
  %2331 = vmatpush1.msra.mxu0 0.0
  %2332 = vmatprep.subr.mxu0 0.0
  %2333 = vmatpush1.msra.mxu0 0.0
  %2334 = vmatprep.subr.mxu0 0.0
  %2335 = vmatpush1.msra.mxu0 0.0
  %2336 = vmatprep.subr.mxu0 0.0
  %2337 = vmatpush1.msra.mxu0 0.0
  %2338 = vmatprep.subr.mxu0 0.0
  %2339 = vmatpush1.msra.mxu0 0.0
  %2340 = vmatprep.subr.mxu0 0.0
  %2341 = vmatpush1.msra.mxu0 0.0
  %2342 = vmatprep.subr.mxu0 0.0
  %2343 = vmatpush1.msra.mxu0 0.0
  %2344 = vmatprep.subr.mxu0 0.0
  %2345 = vmatpush1.msra.mxu0 0.0
  %2346 = vmatprep.mubr.f32.mxu0 0.0
  %2347 = vmatmul.mubr.f32.gmra.mrb[0].mxu0 %v2280
  %v2348 = vpop.f32.mrb[0].mxu0
  %v2349 = vadd.f32 0.0, %v2348
  %v2350 = vpop.f32.mrb[0].mxu0
  %2351 = vdwg.mxu0
  %2352 = vst [vmem:[%s22] sm:$0xff] %v2349
  // Predicated region
  $region90: #{text_encoder.1} parent=0 // pred_check
    _
  $region91: #{text_encoder.1} parent=0 // pred_check_branch
    %2354 = sbr.rel (0) target = $region93
  $region92: #{text_encoder.1} parent=0 // pred_region
    _
  $region93: #{text_encoder.1} parent=0 // pred_fallthru
    _
  // Predicated region
  $region94: #{text_encoder.1} parent=0 // pred_check
    _
  $region95: #{text_encoder.1} parent=0 // pred_check_branch
    %2356 = sbr.rel (0) target = $region97
  $region96: #{text_encoder.1} parent=0 // pred_region
    _
  $region97: #{text_encoder.1} parent=0 // pred_fallthru
    _

</llo_original>
